<compile_context>
chip_gen: v7x
topology: tpu7x:2x2x1
jax: 0.10.0
libtpu: 0.0.40
codegen_flags: <defaults>
</compile_context>

<pallas_src>
import jax
import jax.numpy as jnp
from jax.experimental import pallas as pl
from jax.experimental.pallas import tpu as pltpu

# Small, deterministic stand-ins for T5 (real: VOCAB=32128, MATMUL_VOCAB=32100,
# D_MODEL=512/768).  Chosen so the toy output last dim is already lane-dense.
VOCAB = 256
MATMUL_VOCAB = 200
D_MODEL = 128


def _round_up(x, m):
    return ((x + m - 1) // m) * m


def _vmem_capacity_bytes():
    try:
        return int(pltpu.get_tpu_info().vmem_capacity_bytes)
    except Exception:
        return 64 << 20  # conservative fallback = v7x physical VMEM


# --------------------------------------------------------------------------------------
# Path 1: integer-id embedding lookup — HBM-resident table, double-buffered row gather.
# --------------------------------------------------------------------------------------
def _gather_kernel(ids_ref, w_hbm, o_ref, buf, sems):
    """Gather `chunk` embedding rows per grid step; prefetch the next chunk while
    the current one is written back (manual double buffering, P4)."""
    chunk, _ = o_ref.shape
    i = pl.program_id(0)
    n = pl.num_programs(0)
    slot = i % 2

    def issue(step, s):
        base = step * chunk
        for j in range(chunk):
            row = ids_ref[base + j]
            pltpu.make_async_copy(
                w_hbm.at[pl.ds(row, 1), :],
                buf.at[s, pl.ds(j, 1), :],
                sems.at[s],
            ).start()

    # Prime the pipeline on the very first grid step.
    @pl.when(i == 0)
    def _():
        issue(0, 0)

    # Start next chunk's row fetches first so their HBM latency overlaps with this
    # chunk's copy-out and with Pallas's output write-back DMA.
    @pl.when(i + 1 < n)
    def _():
        issue(i + 1, 1 - slot)

    # Wait for this chunk's rows.  All row copies of a slot share one semaphore;
    # each wait below drains exactly one row-copy's worth (fixed-shape dummy src,
    # so no SMEM id re-reads are needed after the wait).
    for j in range(chunk):
        pltpu.make_async_copy(
            w_hbm.at[pl.ds(0, 1), :],
            buf.at[slot, pl.ds(j, 1), :],
            sems.at[slot],
        ).wait()

    # Lane-dense (chunk, D) store; HBM write-back is pipelined by Pallas.
    o_ref[...] = buf[slot]


def embedding_lookup(ids, weight, *, chunk=128):
    """ids: (B, S) integer, weight: (V, D) -> (B, S, D)."""
    B, S = ids.shape
    V, D = weight.shape
    M = B * S

    # Sublane alignment for the output tile (8 for f32, 16 for bf16, 32 for int8).
    sub = max(8, 32 // jnp.dtype(weight.dtype).itemsize)
    chunk = _round_up(min(chunk, _round_up(M, sub)), sub)
    Mp = _round_up(M, chunk)

    # Clamp ids for safety (an OOB DMA would silently read an arbitrary row).
    # NOTE: PyTorch's Embedding would raise on out-of-range ids; we clip instead.
    ids_flat = jnp.clip(ids.reshape(M).astype(jnp.int32), 0, V - 1)
    ids_flat = jnp.pad(ids_flat, (0, Mp - M))  # padded slots gather row 0, dropped later

    out = pl.pallas_call(
        _gather_kernel,
        out_shape=jax.ShapeDtypeStruct((Mp, D), weight.dtype),
        grid_spec=pltpu.PrefetchScalarGridSpec(
            num_scalar_prefetch=1,                        # token ids -> SMEM
            grid=(Mp // chunk,),
            in_specs=[pl.BlockSpec(memory_space=pl.ANY)],  # table stays in HBM
            out_specs=pl.BlockSpec((chunk, D), lambda i, ids: (i, 0)),
            scratch_shapes=[
                pltpu.VMEM((2, chunk, D), weight.dtype),   # double buffer
                pltpu.SemaphoreType.DMA((2,)),             # one sem per slot
            ],
        ),
        # Cross-step prefetch carries state in scratch/semaphores -> the grid axis
        # must execute sequentially ("arbitrary"), never megacore-sharded.
        compiler_params=pltpu.CompilerParams(
            dimension_semantics=("arbitrary",),
        ),
    )(ids_flat, weight)
    # TODO(synk): on v5e/v6e a VMEM-resident-table variant (bf16 table, ~47 MiB)
    # would remove the HBM gather entirely; skipped here to stay v7x-safe.
    return out[:M].reshape(B, S, D)


# --------------------------------------------------------------------------------------
# Path 2: float "soft" mask @ weight[:MATMUL_VOCAB, :] — K-tiled MXU accumulation.
# --------------------------------------------------------------------------------------
def _matmul_kernel(x_ref, w_ref, o_ref):
    k = pl.program_id(1)

    @pl.when(k == 0)
    def _():
        o_ref[...] = jnp.zeros_like(o_ref)

    # bf16 operands -> fast MXU mode; f32 accumulation into the resident output block.
    a = x_ref[...].astype(jnp.bfloat16)
    b = w_ref[...].astype(jnp.bfloat16)
    o_ref[...] += jnp.dot(a, b, preferred_element_type=jnp.float32)


def soft_embedding_matmul(mask, weight, *, matmul_vocab=MATMUL_VOCAB,
                          tile_m=512, tile_k=512):
    """mask: (B, S, matmul_vocab) float, weight: (V, D) -> (B, S, D) float32."""
    B, S, Vm = mask.shape
    assert Vm == matmul_vocab
    V, D = weight.shape
    M = B * S
    M8 = _round_up(M, 8)

    # K tile: large and MXU-aligned (256-deep on v6e/v7x), clamped to the padded vocab.
    tk = max(128, min((tile_k // 128) * 128, _round_up(Vm, 128)))
    Kp = _round_up(Vm, tk)

    # M tile: as big as possible (less weight re-streaming), but keep >= 2 M tiles
    # so both v7x TensorCores get work on the "parallel" axis.
    tm = min(tile_m, M8)
    if M8 // tm < 2 and M8 >= 16:
        tm = _round_up(M8 // 2, 8)
    Mp = _round_up(M, tm)

    # Weight view covering Kp reduction rows.  Zero-padded mask columns make rows
    # [Vm, Kp) contribute nothing, so when Kp <= V the full table is used as-is
    # (no copy).  Otherwise (real T5: Kp=32256 > V=32128) zero-pad the static weight
    # once -- in a real module this is hoisted to __init__.
    if Kp <= V:
        w_use = weight
    else:
        w_use = jnp.zeros((Kp, D), weight.dtype).at[:Vm, :].set(weight[:Vm, :])
    # Storing the table as bf16 at init would additionally halve weight HBM traffic.

    x2d = mask.reshape(M, Vm).astype(jnp.float32)
    # TODO(synk): at production sizes, have the producer emit an already (Mp, Kp)
    # padded mask (or fuse the pad via allow_input_fusion) to avoid this extra HBM pass.
    x_pad = jnp.pad(x2d, ((0, Mp - M), (0, Kp - Vm)))

    grid = (Mp // tm, Kp // tk)

    # Generation-aware VMEM budget: double-buffered input tiles + resident f32 output.
    cap = _vmem_capacity_bytes()
    need = 2 * (tm * tk + tk * D) * 4 + tm * D * 4
    vmem_limit = int(min(max(2 * need, 16 << 20), int(0.70 * cap)))

    out = pl.pallas_call(
        _matmul_kernel,
        out_shape=jax.ShapeDtypeStruct((Mp, D), jnp.float32),
        grid_spec=pltpu.PrefetchScalarGridSpec(
            num_scalar_prefetch=0,
            grid=grid,
            in_specs=[
                pl.BlockSpec((tm, tk), lambda i, k: (i, k)),  # mask tile
                pl.BlockSpec((tk, D), lambda i, k: (k, 0)),   # weight K-panel
            ],
            out_specs=pl.BlockSpec((tm, D), lambda i, k: (i, 0)),  # resident across k
        ),
        compiler_params=pltpu.CompilerParams(
            dimension_semantics=("parallel", "arbitrary"),
            vmem_limit_bytes=vmem_limit,
        ),
    )(x_pad, w_use)
    return out[:M].reshape(B, S, D)


# --------------------------------------------------------------------------------------
# Module-equivalent wrapper
# --------------------------------------------------------------------------------------
def embedding_forward(mask, weight):
    if mask.ndim == 2:
        assert jnp.issubdtype(mask.dtype, jnp.integer)
        return embedding_lookup(mask, weight)
    assert jnp.issubdtype(mask.dtype, jnp.floating)
    return soft_embedding_matmul(mask, weight)


if __name__ == "__main__":
    key = jax.random.PRNGKey(0)
    k_w, k_ids, k_mask = jax.random.split(key, 3)

    # Deterministic synthetic "embedding layer" weight.
    weight = jax.random.normal(k_w, (VOCAB, D_MODEL), dtype=jnp.float32) * 0.02

    B, S = 2, 8
    # Path 1 input: integer token ids (torch.long analogue -> int32 on TPU).
    ids = jax.random.randint(k_ids, (B, S), 0, VOCAB, dtype=jnp.int32)
    # Path 2 input: float soft mask over the (sliced) vocab.
    soft_mask = jax.random.normal(k_mask, (B, S, MATMUL_VOCAB), dtype=jnp.float32)

    out_lookup = jax.block_until_ready(embedding_forward(ids, weight))
    # Small chunk to also exercise the multi-step, double-buffered gather path.
    out_lookup_db = jax.block_until_ready(embedding_lookup(ids, weight, chunk=8))
    out_matmul = jax.block_until_ready(embedding_forward(soft_mask, weight))

    # Correctness checks against plain-JAX references.
    ref_lookup = jnp.take(weight, ids, axis=0)
    ref_matmul = jnp.matmul(soft_mask, weight[:MATMUL_VOCAB, :])
    assert out_lookup.shape == (B, S, D_MODEL)
    assert out_matmul.shape == (B, S, D_MODEL)
    assert jnp.allclose(out_lookup, ref_lookup)
    assert jnp.allclose(out_lookup_db, ref_lookup)
    # bf16 MXU operands with f32 accumulation -> looser tolerance than pure-f32.
    assert jnp.allclose(out_matmul, ref_matmul, atol=1e-2, rtol=1e-2)

    print("KERNEL_OK")
</pallas_src>

<mosaic_0001>
module attributes {stable_mosaic.version = 11 : i64} {
  func.func @_gather_kernel(%arg0: i32, %arg1: memref<16xi32, #tpu.memory_space<smem>>, %arg2: memref<256x128xf32, #tpu.memory_space<any>>, %arg3: memref<16x128xf32, #tpu.memory_space<vmem>>, %arg4: memref<2x16x128xf32, #tpu.memory_space<vmem>>, %arg5: memref<2x!tpu.dma_semaphore, #tpu.memory_space<semaphore_mem>>) attributes {dimension_semantics = [#tpu.dimension_semantics<arbitrary>], iteration_bounds = array<i64: 1>, scalar_prefetch = 1 : i64, scratch_operands = 2 : i64, tpu.core_type = #tpu.core_type<tc>, window_params = [{}, {transform_indices = @transform_1, window_bounds = array<i64: 16, 128>}]} {
    %c2_i32 = arith.constant 2 : i32
    %c0_i32 = arith.constant 0 : i32
    %0 = arith.cmpi eq, %c2_i32, %c0_i32 : i32
    %c1_i32 = arith.constant 1 : i32
    %1 = arith.select %0, %c1_i32, %c2_i32 : i32
    %2 = arith.remsi %arg0, %1 : i32
    %c0_i32_0 = arith.constant 0 : i32
    %3 = arith.cmpi ne, %2, %c0_i32_0 : i32
    %c0_i32_1 = arith.constant 0 : i32
    %4 = arith.cmpi slt, %2, %c0_i32_1 : i32
    %c0_i32_2 = arith.constant 0 : i32
    %5 = arith.cmpi slt, %1, %c0_i32_2 : i32
    %6 = arith.xori %4, %5 : i1
    %7 = arith.andi %6, %3 : i1
    %8 = arith.addi %2, %1 : i32
    %9 = arith.select %7, %8, %2 : i32
    %c0_i32_3 = arith.constant 0 : i32
    %10 = arith.cmpi eq, %arg0, %c0_i32_3 : i32
    %11 = arith.extui %10 : i1 to i32
    %c0_i32_4 = arith.constant 0 : i32
    %12 = arith.cmpi ne, %11, %c0_i32_4 : i32
    scf.if %12 {
      %c0_62 = arith.constant 0 : index
      %101 = memref.load %arg1[%c0_62] : memref<16xi32, #tpu.memory_space<smem>>
      %c0_i32_63 = arith.constant 0 : i32
      %c0_i32_64 = arith.constant 0 : i32
      %c0_i32_65 = arith.constant 0 : i32
      %102 = tpu.memref_slice %arg2[%101, %c0_i32_65] : memref<256x128xf32, #tpu.memory_space<any>> -> memref<1x128xf32, #tpu.memory_space<any>>
      %c0_i32_66 = arith.constant 0 : i32
      %c0_i32_67 = arith.constant 0 : i32
      %103 = tpu.memref_slice %arg4[%c0_i32_63, %c0_i32_66, %c0_i32_67] : memref<2x16x128xf32, #tpu.memory_space<vmem>> -> memref<1x1x128xf32, #tpu.memory_space<vmem>>
      %104 = tpu.memref_squeeze %103 : memref<1x1x128xf32, #tpu.memory_space<vmem>> -> memref<1x128xf32, #tpu.memory_space<vmem>>
      %105 = tpu.memref_slice %arg5[%c0_i32_64] : memref<2x!tpu.dma_semaphore, #tpu.memory_space<semaphore_mem>> -> memref<1x!tpu.dma_semaphore, #tpu.memory_space<semaphore_mem>>
      %106 = tpu.memref_squeeze %105 : memref<1x!tpu.dma_semaphore, #tpu.memory_space<semaphore_mem>> -> memref<!tpu.dma_semaphore, #tpu.memory_space<semaphore_mem>>
      tpu.enqueue_dma source(%102 : memref<1x128xf32, #tpu.memory_space<any>>) target(%104 : memref<1x128xf32, #tpu.memory_space<vmem>>) target_semaphore(%106 : memref<!tpu.dma_semaphore, #tpu.memory_space<semaphore_mem>>)
      %c1 = arith.constant 1 : index
      %107 = memref.load %arg1[%c1] : memref<16xi32, #tpu.memory_space<smem>>
      %c0_i32_68 = arith.constant 0 : i32
      %c0_i32_69 = arith.constant 0 : i32
      %c0_i32_70 = arith.constant 0 : i32
      %108 = tpu.memref_slice %arg2[%107, %c0_i32_70] : memref<256x128xf32, #tpu.memory_space<any>> -> memref<1x128xf32, #tpu.memory_space<any>>
      %c1_i32_71 = arith.constant 1 : i32
      %c0_i32_72 = arith.constant 0 : i32
      %109 = tpu.memref_slice %arg4[%c0_i32_68, %c1_i32_71, %c0_i32_72] : memref<2x16x128xf32, #tpu.memory_space<vmem>> -> memref<1x1x128xf32, #tpu.memory_space<vmem>>
      %110 = tpu.memref_squeeze %109 : memref<1x1x128xf32, #tpu.memory_space<vmem>> -> memref<1x128xf32, #tpu.memory_space<vmem>>
      %111 = tpu.memref_slice %arg5[%c0_i32_69] : memref<2x!tpu.dma_semaphore, #tpu.memory_space<semaphore_mem>> -> memref<1x!tpu.dma_semaphore, #tpu.memory_space<semaphore_mem>>
      %112 = tpu.memref_squeeze %111 : memref<1x!tpu.dma_semaphore, #tpu.memory_space<semaphore_mem>> -> memref<!tpu.dma_semaphore, #tpu.memory_space<semaphore_mem>>
      tpu.enqueue_dma source(%108 : memref<1x128xf32, #tpu.memory_space<any>>) target(%110 : memref<1x128xf32, #tpu.memory_space<vmem>>) target_semaphore(%112 : memref<!tpu.dma_semaphore, #tpu.memory_space<semaphore_mem>>)
      %c2 = arith.constant 2 : index
      %113 = memref.load %arg1[%c2] : memref<16xi32, #tpu.memory_space<smem>>
      %c0_i32_73 = arith.constant 0 : i32
      %c0_i32_74 = arith.constant 0 : i32
      %c0_i32_75 = arith.constant 0 : i32
      %114 = tpu.memref_slice %arg2[%113, %c0_i32_75] : memref<256x128xf32, #tpu.memory_space<any>> -> memref<1x128xf32, #tpu.memory_space<any>>
      %c2_i32_76 = arith.constant 2 : i32
      %c0_i32_77 = arith.constant 0 : i32
      %115 = tpu.memref_slice %arg4[%c0_i32_73, %c2_i32_76, %c0_i32_77] : memref<2x16x128xf32, #tpu.memory_space<vmem>> -> memref<1x1x128xf32, #tpu.memory_space<vmem>>
      %116 = tpu.memref_squeeze %115 : memref<1x1x128xf32, #tpu.memory_space<vmem>> -> memref<1x128xf32, #tpu.memory_space<vmem>>
      %117 = tpu.memref_slice %arg5[%c0_i32_74] : memref<2x!tpu.dma_semaphore, #tpu.memory_space<semaphore_mem>> -> memref<1x!tpu.dma_semaphore, #tpu.memory_space<semaphore_mem>>
      %118 = tpu.memref_squeeze %117 : memref<1x!tpu.dma_semaphore, #tpu.memory_space<semaphore_mem>> -> memref<!tpu.dma_semaphore, #tpu.memory_space<semaphore_mem>>
      tpu.enqueue_dma source(%114 : memref<1x128xf32, #tpu.memory_space<any>>) target(%116 : memref<1x128xf32, #tpu.memory_space<vmem>>) target_semaphore(%118 : memref<!tpu.dma_semaphore, #tpu.memory_space<semaphore_mem>>)
      %c3 = arith.constant 3 : index
      %119 = memref.load %arg1[%c3] : memref<16xi32, #tpu.memory_space<smem>>
      %c0_i32_78 = arith.constant 0 : i32
      %c0_i32_79 = arith.constant 0 : i32
      %c0_i32_80 = arith.constant 0 : i32
      %120 = tpu.memref_slice %arg2[%119, %c0_i32_80] : memref<256x128xf32, #tpu.memory_space<any>> -> memref<1x128xf32, #tpu.memory_space<any>>
      %c3_i32_81 = arith.constant 3 : i32
      %c0_i32_82 = arith.constant 0 : i32
      %121 = tpu.memref_slice %arg4[%c0_i32_78, %c3_i32_81, %c0_i32_82] : memref<2x16x128xf32, #tpu.memory_space<vmem>> -> memref<1x1x128xf32, #tpu.memory_space<vmem>>
      %122 = tpu.memref_squeeze %121 : memref<1x1x128xf32, #tpu.memory_space<vmem>> -> memref<1x128xf32, #tpu.memory_space<vmem>>
      %123 = tpu.memref_slice %arg5[%c0_i32_79] : memref<2x!tpu.dma_semaphore, #tpu.memory_space<semaphore_mem>> -> memref<1x!tpu.dma_semaphore, #tpu.memory_space<semaphore_mem>>
      %124 = tpu.memref_squeeze %123 : memref<1x!tpu.dma_semaphore, #tpu.memory_space<semaphore_mem>> -> memref<!tpu.dma_semaphore, #tpu.memory_space<semaphore_mem>>
      tpu.enqueue_dma source(%120 : memref<1x128xf32, #tpu.memory_space<any>>) target(%122 : memref<1x128xf32, #tpu.memory_space<vmem>>) target_semaphore(%124 : memref<!tpu.dma_semaphore, #tpu.memory_space<semaphore_mem>>)
      %c4 = arith.constant 4 : index
      %125 = memref.load %arg1[%c4] : memref<16xi32, #tpu.memory_space<smem>>
      %c0_i32_83 = arith.constant 0 : i32
      %c0_i32_84 = arith.constant 0 : i32
      %c0_i32_85 = arith.constant 0 : i32
      %126 = tpu.memref_slice %arg2[%125, %c0_i32_85] : memref<256x128xf32, #tpu.memory_space<any>> -> memref<1x128xf32, #tpu.memory_space<any>>
      %c4_i32_86 = arith.constant 4 : i32
      %c0_i32_87 = arith.constant 0 : i32
      %127 = tpu.memref_slice %arg4[%c0_i32_83, %c4_i32_86, %c0_i32_87] : memref<2x16x128xf32, #tpu.memory_space<vmem>> -> memref<1x1x128xf32, #tpu.memory_space<vmem>>
      %128 = tpu.memref_squeeze %127 : memref<1x1x128xf32, #tpu.memory_space<vmem>> -> memref<1x128xf32, #tpu.memory_space<vmem>>
      %129 = tpu.memref_slice %arg5[%c0_i32_84] : memref<2x!tpu.dma_semaphore, #tpu.memory_space<semaphore_mem>> -> memref<1x!tpu.dma_semaphore, #tpu.memory_space<semaphore_mem>>
      %130 = tpu.memref_squeeze %129 : memref<1x!tpu.dma_semaphore, #tpu.memory_space<semaphore_mem>> -> memref<!tpu.dma_semaphore, #tpu.memory_space<semaphore_mem>>
      tpu.enqueue_dma source(%126 : memref<1x128xf32, #tpu.memory_space<any>>) target(%128 : memref<1x128xf32, #tpu.memory_space<vmem>>) target_semaphore(%130 : memref<!tpu.dma_semaphore, #tpu.memory_space<semaphore_mem>>)
      %c5 = arith.constant 5 : index
      %131 = memref.load %arg1[%c5] : memref<16xi32, #tpu.memory_space<smem>>
      %c0_i32_88 = arith.constant 0 : i32
      %c0_i32_89 = arith.constant 0 : i32
      %c0_i32_90 = arith.constant 0 : i32
      %132 = tpu.memref_slice %arg2[%131, %c0_i32_90] : memref<256x128xf32, #tpu.memory_space<any>> -> memref<1x128xf32, #tpu.memory_space<any>>
      %c5_i32_91 = arith.constant 5 : i32
      %c0_i32_92 = arith.constant 0 : i32
      %133 = tpu.memref_slice %arg4[%c0_i32_88, %c5_i32_91, %c0_i32_92] : memref<2x16x128xf32, #tpu.memory_space<vmem>> -> memref<1x1x128xf32, #tpu.memory_space<vmem>>
      %134 = tpu.memref_squeeze %133 : memref<1x1x128xf32, #tpu.memory_space<vmem>> -> memref<1x128xf32, #tpu.memory_space<vmem>>
      %135 = tpu.memref_slice %arg5[%c0_i32_89] : memref<2x!tpu.dma_semaphore, #tpu.memory_space<semaphore_mem>> -> memref<1x!tpu.dma_semaphore, #tpu.memory_space<semaphore_mem>>
      %136 = tpu.memref_squeeze %135 : memref<1x!tpu.dma_semaphore, #tpu.memory_space<semaphore_mem>> -> memref<!tpu.dma_semaphore, #tpu.memory_space<semaphore_mem>>
      tpu.enqueue_dma source(%132 : memref<1x128xf32, #tpu.memory_space<any>>) target(%134 : memref<1x128xf32, #tpu.memory_space<vmem>>) target_semaphore(%136 : memref<!tpu.dma_semaphore, #tpu.memory_space<semaphore_mem>>)
      %c6 = arith.constant 6 : index
      %137 = memref.load %arg1[%c6] : memref<16xi32, #tpu.memory_space<smem>>
      %c0_i32_93 = arith.constant 0 : i32
      %c0_i32_94 = arith.constant 0 : i32
      %c0_i32_95 = arith.constant 0 : i32
      %138 = tpu.memref_slice %arg2[%137, %c0_i32_95] : memref<256x128xf32, #tpu.memory_space<any>> -> memref<1x128xf32, #tpu.memory_space<any>>
      %c6_i32_96 = arith.constant 6 : i32
      %c0_i32_97 = arith.constant 0 : i32
      %139 = tpu.memref_slice %arg4[%c0_i32_93, %c6_i32_96, %c0_i32_97] : memref<2x16x128xf32, #tpu.memory_space<vmem>> -> memref<1x1x128xf32, #tpu.memory_space<vmem>>
      %140 = tpu.memref_squeeze %139 : memref<1x1x128xf32, #tpu.memory_space<vmem>> -> memref<1x128xf32, #tpu.memory_space<vmem>>
      %141 = tpu.memref_slice %arg5[%c0_i32_94] : memref<2x!tpu.dma_semaphore, #tpu.memory_space<semaphore_mem>> -> memref<1x!tpu.dma_semaphore, #tpu.memory_space<semaphore_mem>>
      %142 = tpu.memref_squeeze %141 : memref<1x!tpu.dma_semaphore, #tpu.memory_space<semaphore_mem>> -> memref<!tpu.dma_semaphore, #tpu.memory_space<semaphore_mem>>
      tpu.enqueue_dma source(%138 : memref<1x128xf32, #tpu.memory_space<any>>) target(%140 : memref<1x128xf32, #tpu.memory_space<vmem>>) target_semaphore(%142 : memref<!tpu.dma_semaphore, #tpu.memory_space<semaphore_mem>>)
      %c7 = arith.constant 7 : index
      %143 = memref.load %arg1[%c7] : memref<16xi32, #tpu.memory_space<smem>>
      %c0_i32_98 = arith.constant 0 : i32
      %c0_i32_99 = arith.constant 0 : i32
      %c0_i32_100 = arith.constant 0 : i32
      %144 = tpu.memref_slice %arg2[%143, %c0_i32_100] : memref<256x128xf32, #tpu.memory_space<any>> -> memref<1x128xf32, #tpu.memory_space<any>>
      %c7_i32_101 = arith.constant 7 : i32
      %c0_i32_102 = arith.constant 0 : i32
      %145 = tpu.memref_slice %arg4[%c0_i32_98, %c7_i32_101, %c0_i32_102] : memref<2x16x128xf32, #tpu.memory_space<vmem>> -> memref<1x1x128xf32, #tpu.memory_space<vmem>>
      %146 = tpu.memref_squeeze %145 : memref<1x1x128xf32, #tpu.memory_space<vmem>> -> memref<1x128xf32, #tpu.memory_space<vmem>>
      %147 = tpu.memref_slice %arg5[%c0_i32_99] : memref<2x!tpu.dma_semaphore, #tpu.memory_space<semaphore_mem>> -> memref<1x!tpu.dma_semaphore, #tpu.memory_space<semaphore_mem>>
      %148 = tpu.memref_squeeze %147 : memref<1x!tpu.dma_semaphore, #tpu.memory_space<semaphore_mem>> -> memref<!tpu.dma_semaphore, #tpu.memory_space<semaphore_mem>>
      tpu.enqueue_dma source(%144 : memref<1x128xf32, #tpu.memory_space<any>>) target(%146 : memref<1x128xf32, #tpu.memory_space<vmem>>) target_semaphore(%148 : memref<!tpu.dma_semaphore, #tpu.memory_space<semaphore_mem>>)
      %c8 = arith.constant 8 : index
      %149 = memref.load %arg1[%c8] : memref<16xi32, #tpu.memory_space<smem>>
      %c0_i32_103 = arith.constant 0 : i32
      %c0_i32_104 = arith.constant 0 : i32
      %c0_i32_105 = arith.constant 0 : i32
      %150 = tpu.memref_slice %arg2[%149, %c0_i32_105] : memref<256x128xf32, #tpu.memory_space<any>> -> memref<1x128xf32, #tpu.memory_space<any>>
      %c8_i32_106 = arith.constant 8 : i32
      %c0_i32_107 = arith.constant 0 : i32
      %151 = tpu.memref_slice %arg4[%c0_i32_103, %c8_i32_106, %c0_i32_107] : memref<2x16x128xf32, #tpu.memory_space<vmem>> -> memref<1x1x128xf32, #tpu.memory_space<vmem>>
      %152 = tpu.memref_squeeze %151 : memref<1x1x128xf32, #tpu.memory_space<vmem>> -> memref<1x128xf32, #tpu.memory_space<vmem>>
      %153 = tpu.memref_slice %arg5[%c0_i32_104] : memref<2x!tpu.dma_semaphore, #tpu.memory_space<semaphore_mem>> -> memref<1x!tpu.dma_semaphore, #tpu.memory_space<semaphore_mem>>
      %154 = tpu.memref_squeeze %153 : memref<1x!tpu.dma_semaphore, #tpu.memory_space<semaphore_mem>> -> memref<!tpu.dma_semaphore, #tpu.memory_space<semaphore_mem>>
      tpu.enqueue_dma source(%150 : memref<1x128xf32, #tpu.memory_space<any>>) target(%152 : memref<1x128xf32, #tpu.memory_space<vmem>>) target_semaphore(%154 : memref<!tpu.dma_semaphore, #tpu.memory_space<semaphore_mem>>)
      %c9 = arith.constant 9 : index
      %155 = memref.load %arg1[%c9] : memref<16xi32, #tpu.memory_space<smem>>
      %c0_i32_108 = arith.constant 0 : i32
      %c0_i32_109 = arith.constant 0 : i32
      %c0_i32_110 = arith.constant 0 : i32
      %156 = tpu.memref_slice %arg2[%155, %c0_i32_110] : memref<256x128xf32, #tpu.memory_space<any>> -> memref<1x128xf32, #tpu.memory_space<any>>
      %c9_i32_111 = arith.constant 9 : i32
      %c0_i32_112 = arith.constant 0 : i32
      %157 = tpu.memref_slice %arg4[%c0_i32_108, %c9_i32_111, %c0_i32_112] : memref<2x16x128xf32, #tpu.memory_space<vmem>> -> memref<1x1x128xf32, #tpu.memory_space<vmem>>
      %158 = tpu.memref_squeeze %157 : memref<1x1x128xf32, #tpu.memory_space<vmem>> -> memref<1x128xf32, #tpu.memory_space<vmem>>
      %159 = tpu.memref_slice %arg5[%c0_i32_109] : memref<2x!tpu.dma_semaphore, #tpu.memory_space<semaphore_mem>> -> memref<1x!tpu.dma_semaphore, #tpu.memory_space<semaphore_mem>>
      %160 = tpu.memref_squeeze %159 : memref<1x!tpu.dma_semaphore, #tpu.memory_space<semaphore_mem>> -> memref<!tpu.dma_semaphore, #tpu.memory_space<semaphore_mem>>
      tpu.enqueue_dma source(%156 : memref<1x128xf32, #tpu.memory_space<any>>) target(%158 : memref<1x128xf32, #tpu.memory_space<vmem>>) target_semaphore(%160 : memref<!tpu.dma_semaphore, #tpu.memory_space<semaphore_mem>>)
      %c10 = arith.constant 10 : index
      %161 = memref.load %arg1[%c10] : memref<16xi32, #tpu.memory_space<smem>>
      %c0_i32_113 = arith.constant 0 : i32
      %c0_i32_114 = arith.constant 0 : i32
      %c0_i32_115 = arith.constant 0 : i32
      %162 = tpu.memref_slice %arg2[%161, %c0_i32_115] : memref<256x128xf32, #tpu.memory_space<any>> -> memref<1x128xf32, #tpu.memory_space<any>>
      %c10_i32_116 = arith.constant 10 : i32
      %c0_i32_117 = arith.constant 0 : i32
      %163 = tpu.memref_slice %arg4[%c0_i32_113, %c10_i32_116, %c0_i32_117] : memref<2x16x128xf32, #tpu.memory_space<vmem>> -> memref<1x1x128xf32, #tpu.memory_space<vmem>>
      %164 = tpu.memref_squeeze %163 : memref<1x1x128xf32, #tpu.memory_space<vmem>> -> memref<1x128xf32, #tpu.memory_space<vmem>>
      %165 = tpu.memref_slice %arg5[%c0_i32_114] : memref<2x!tpu.dma_semaphore, #tpu.memory_space<semaphore_mem>> -> memref<1x!tpu.dma_semaphore, #tpu.memory_space<semaphore_mem>>
      %166 = tpu.memref_squeeze %165 : memref<1x!tpu.dma_semaphore, #tpu.memory_space<semaphore_mem>> -> memref<!tpu.dma_semaphore, #tpu.memory_space<semaphore_mem>>
      tpu.enqueue_dma source(%162 : memref<1x128xf32, #tpu.memory_space<any>>) target(%164 : memref<1x128xf32, #tpu.memory_space<vmem>>) target_semaphore(%166 : memref<!tpu.dma_semaphore, #tpu.memory_space<semaphore_mem>>)
      %c11 = arith.constant 11 : index
      %167 = memref.load %arg1[%c11] : memref<16xi32, #tpu.memory_space<smem>>
      %c0_i32_118 = arith.constant 0 : i32
      %c0_i32_119 = arith.constant 0 : i32
      %c0_i32_120 = arith.constant 0 : i32
      %168 = tpu.memref_slice %arg2[%167, %c0_i32_120] : memref<256x128xf32, #tpu.memory_space<any>> -> memref<1x128xf32, #tpu.memory_space<any>>
      %c11_i32_121 = arith.constant 11 : i32
      %c0_i32_122 = arith.constant 0 : i32
      %169 = tpu.memref_slice %arg4[%c0_i32_118, %c11_i32_121, %c0_i32_122] : memref<2x16x128xf32, #tpu.memory_space<vmem>> -> memref<1x1x128xf32, #tpu.memory_space<vmem>>
      %170 = tpu.memref_squeeze %169 : memref<1x1x128xf32, #tpu.memory_space<vmem>> -> memref<1x128xf32, #tpu.memory_space<vmem>>
      %171 = tpu.memref_slice %arg5[%c0_i32_119] : memref<2x!tpu.dma_semaphore, #tpu.memory_space<semaphore_mem>> -> memref<1x!tpu.dma_semaphore, #tpu.memory_space<semaphore_mem>>
      %172 = tpu.memref_squeeze %171 : memref<1x!tpu.dma_semaphore, #tpu.memory_space<semaphore_mem>> -> memref<!tpu.dma_semaphore, #tpu.memory_space<semaphore_mem>>
      tpu.enqueue_dma source(%168 : memref<1x128xf32, #tpu.memory_space<any>>) target(%170 : memref<1x128xf32, #tpu.memory_space<vmem>>) target_semaphore(%172 : memref<!tpu.dma_semaphore, #tpu.memory_space<semaphore_mem>>)
      %c12 = arith.constant 12 : index
      %173 = memref.load %arg1[%c12] : memref<16xi32, #tpu.memory_space<smem>>
      %c0_i32_123 = arith.constant 0 : i32
      %c0_i32_124 = arith.constant 0 : i32
      %c0_i32_125 = arith.constant 0 : i32
      %174 = tpu.memref_slice %arg2[%173, %c0_i32_125] : memref<256x128xf32, #tpu.memory_space<any>> -> memref<1x128xf32, #tpu.memory_space<any>>
      %c12_i32_126 = arith.constant 12 : i32
      %c0_i32_127 = arith.constant 0 : i32
      %175 = tpu.memref_slice %arg4[%c0_i32_123, %c12_i32_126, %c0_i32_127] : memref<2x16x128xf32, #tpu.memory_space<vmem>> -> memref<1x1x128xf32, #tpu.memory_space<vmem>>
      %176 = tpu.memref_squeeze %175 : memref<1x1x128xf32, #tpu.memory_space<vmem>> -> memref<1x128xf32, #tpu.memory_space<vmem>>
      %177 = tpu.memref_slice %arg5[%c0_i32_124] : memref<2x!tpu.dma_semaphore, #tpu.memory_space<semaphore_mem>> -> memref<1x!tpu.dma_semaphore, #tpu.memory_space<semaphore_mem>>
      %178 = tpu.memref_squeeze %177 : memref<1x!tpu.dma_semaphore, #tpu.memory_space<semaphore_mem>> -> memref<!tpu.dma_semaphore, #tpu.memory_space<semaphore_mem>>
      tpu.enqueue_dma source(%174 : memref<1x128xf32, #tpu.memory_space<any>>) target(%176 : memref<1x128xf32, #tpu.memory_space<vmem>>) target_semaphore(%178 : memref<!tpu.dma_semaphore, #tpu.memory_space<semaphore_mem>>)
      %c13 = arith.constant 13 : index
      %179 = memref.load %arg1[%c13] : memref<16xi32, #tpu.memory_space<smem>>
      %c0_i32_128 = arith.constant 0 : i32
      %c0_i32_129 = arith.constant 0 : i32
      %c0_i32_130 = arith.constant 0 : i32
      %180 = tpu.memref_slice %arg2[%179, %c0_i32_130] : memref<256x128xf32, #tpu.memory_space<any>> -> memref<1x128xf32, #tpu.memory_space<any>>
      %c13_i32_131 = arith.constant 13 : i32
      %c0_i32_132 = arith.constant 0 : i32
      %181 = tpu.memref_slice %arg4[%c0_i32_128, %c13_i32_131, %c0_i32_132] : memref<2x16x128xf32, #tpu.memory_space<vmem>> -> memref<1x1x128xf32, #tpu.memory_space<vmem>>
      %182 = tpu.memref_squeeze %181 : memref<1x1x128xf32, #tpu.memory_space<vmem>> -> memref<1x128xf32, #tpu.memory_space<vmem>>
      %183 = tpu.memref_slice %arg5[%c0_i32_129] : memref<2x!tpu.dma_semaphore, #tpu.memory_space<semaphore_mem>> -> memref<1x!tpu.dma_semaphore, #tpu.memory_space<semaphore_mem>>
      %184 = tpu.memref_squeeze %183 : memref<1x!tpu.dma_semaphore, #tpu.memory_space<semaphore_mem>> -> memref<!tpu.dma_semaphore, #tpu.memory_space<semaphore_mem>>
      tpu.enqueue_dma source(%180 : memref<1x128xf32, #tpu.memory_space<any>>) target(%182 : memref<1x128xf32, #tpu.memory_space<vmem>>) target_semaphore(%184 : memref<!tpu.dma_semaphore, #tpu.memory_space<semaphore_mem>>)
      %c14 = arith.constant 14 : index
      %185 = memref.load %arg1[%c14] : memref<16xi32, #tpu.memory_space<smem>>
      %c0_i32_133 = arith.constant 0 : i32
      %c0_i32_134 = arith.constant 0 : i32
      %c0_i32_135 = arith.constant 0 : i32
      %186 = tpu.memref_slice %arg2[%185, %c0_i32_135] : memref<256x128xf32, #tpu.memory_space<any>> -> memref<1x128xf32, #tpu.memory_space<any>>
      %c14_i32_136 = arith.constant 14 : i32
      %c0_i32_137 = arith.constant 0 : i32
      %187 = tpu.memref_slice %arg4[%c0_i32_133, %c14_i32_136, %c0_i32_137] : memref<2x16x128xf32, #tpu.memory_space<vmem>> -> memref<1x1x128xf32, #tpu.memory_space<vmem>>
      %188 = tpu.memref_squeeze %187 : memref<1x1x128xf32, #tpu.memory_space<vmem>> -> memref<1x128xf32, #tpu.memory_space<vmem>>
      %189 = tpu.memref_slice %arg5[%c0_i32_134] : memref<2x!tpu.dma_semaphore, #tpu.memory_space<semaphore_mem>> -> memref<1x!tpu.dma_semaphore, #tpu.memory_space<semaphore_mem>>
      %190 = tpu.memref_squeeze %189 : memref<1x!tpu.dma_semaphore, #tpu.memory_space<semaphore_mem>> -> memref<!tpu.dma_semaphore, #tpu.memory_space<semaphore_mem>>
      tpu.enqueue_dma source(%186 : memref<1x128xf32, #tpu.memory_space<any>>) target(%188 : memref<1x128xf32, #tpu.memory_space<vmem>>) target_semaphore(%190 : memref<!tpu.dma_semaphore, #tpu.memory_space<semaphore_mem>>)
      %c15 = arith.constant 15 : index
      %191 = memref.load %arg1[%c15] : memref<16xi32, #tpu.memory_space<smem>>
      %c0_i32_138 = arith.constant 0 : i32
      %c0_i32_139 = arith.constant 0 : i32
      %c0_i32_140 = arith.constant 0 : i32
      %192 = tpu.memref_slice %arg2[%191, %c0_i32_140] : memref<256x128xf32, #tpu.memory_space<any>> -> memref<1x128xf32, #tpu.memory_space<any>>
      %c15_i32_141 = arith.constant 15 : i32
      %c0_i32_142 = arith.constant 0 : i32
      %193 = tpu.memref_slice %arg4[%c0_i32_138, %c15_i32_141, %c0_i32_142] : memref<2x16x128xf32, #tpu.memory_space<vmem>> -> memref<1x1x128xf32, #tpu.memory_space<vmem>>
      %194 = tpu.memref_squeeze %193 : memref<1x1x128xf32, #tpu.memory_space<vmem>> -> memref<1x128xf32, #tpu.memory_space<vmem>>
      %195 = tpu.memref_slice %arg5[%c0_i32_139] : memref<2x!tpu.dma_semaphore, #tpu.memory_space<semaphore_mem>> -> memref<1x!tpu.dma_semaphore, #tpu.memory_space<semaphore_mem>>
      %196 = tpu.memref_squeeze %195 : memref<1x!tpu.dma_semaphore, #tpu.memory_space<semaphore_mem>> -> memref<!tpu.dma_semaphore, #tpu.memory_space<semaphore_mem>>
      tpu.enqueue_dma source(%192 : memref<1x128xf32, #tpu.memory_space<any>>) target(%194 : memref<1x128xf32, #tpu.memory_space<vmem>>) target_semaphore(%196 : memref<!tpu.dma_semaphore, #tpu.memory_space<semaphore_mem>>)
    } else {
    }
    %c1_i32_5 = arith.constant 1 : i32
    %13 = arith.addi %arg0, %c1_i32_5 : i32
    %c1_i32_6 = arith.constant 1 : i32
    %14 = arith.cmpi slt, %13, %c1_i32_6 : i32
    %15 = arith.extui %14 : i1 to i32
    %c0_i32_7 = arith.constant 0 : i32
    %16 = arith.cmpi ne, %15, %c0_i32_7 : i32
    scf.if %16 {
      %c1_i32_62 = arith.constant 1 : i32
      %101 = arith.addi %arg0, %c1_i32_62 : i32
      %c1_i32_63 = arith.constant 1 : i32
      %102 = arith.subi %c1_i32_63, %9 : i32
      %c16_i32 = arith.constant 16 : i32
      %103 = arith.muli %101, %c16_i32 : i32
      %c0_i32_64 = arith.constant 0 : i32
      %104 = arith.addi %103, %c0_i32_64 : i32
      %105 = arith.index_cast %104 : i32 to index
      %106 = memref.load %arg1[%105] : memref<16xi32, #tpu.memory_space<smem>>
      %c0_i32_65 = arith.constant 0 : i32
      %107 = tpu.memref_slice %arg2[%106, %c0_i32_65] : memref<256x128xf32, #tpu.memory_space<any>> -> memref<1x128xf32, #tpu.memory_space<any>>
      %c0_i32_66 = arith.constant 0 : i32
      %c0_i32_67 = arith.constant 0 : i32
      %108 = tpu.memref_slice %arg4[%102, %c0_i32_66, %c0_i32_67] : memref<2x16x128xf32, #tpu.memory_space<vmem>> -> memref<1x1x128xf32, #tpu.memory_space<vmem>>
      %109 = tpu.memref_squeeze %108 : memref<1x1x128xf32, #tpu.memory_space<vmem>> -> memref<1x128xf32, #tpu.memory_space<vmem>>
      %110 = tpu.memref_slice %arg5[%102] : memref<2x!tpu.dma_semaphore, #tpu.memory_space<semaphore_mem>> -> memref<1x!tpu.dma_semaphore, #tpu.memory_space<semaphore_mem>>
      %111 = tpu.memref_squeeze %110 : memref<1x!tpu.dma_semaphore, #tpu.memory_space<semaphore_mem>> -> memref<!tpu.dma_semaphore, #tpu.memory_space<semaphore_mem>>
      tpu.enqueue_dma source(%107 : memref<1x128xf32, #tpu.memory_space<any>>) target(%109 : memref<1x128xf32, #tpu.memory_space<vmem>>) target_semaphore(%111 : memref<!tpu.dma_semaphore, #tpu.memory_space<semaphore_mem>>)
      %c1_i32_68 = arith.constant 1 : i32
      %112 = arith.addi %103, %c1_i32_68 : i32
      %113 = arith.index_cast %112 : i32 to index
      %114 = memref.load %arg1[%113] : memref<16xi32, #tpu.memory_space<smem>>
      %c0_i32_69 = arith.constant 0 : i32
      %115 = tpu.memref_slice %arg2[%114, %c0_i32_69] : memref<256x128xf32, #tpu.memory_space<any>> -> memref<1x128xf32, #tpu.memory_space<any>>
      %c1_i32_70 = arith.constant 1 : i32
      %c0_i32_71 = arith.constant 0 : i32
      %116 = tpu.memref_slice %arg4[%102, %c1_i32_70, %c0_i32_71] : memref<2x16x128xf32, #tpu.memory_space<vmem>> -> memref<1x1x128xf32, #tpu.memory_space<vmem>>
      %117 = tpu.memref_squeeze %116 : memref<1x1x128xf32, #tpu.memory_space<vmem>> -> memref<1x128xf32, #tpu.memory_space<vmem>>
      %118 = tpu.memref_slice %arg5[%102] : memref<2x!tpu.dma_semaphore, #tpu.memory_space<semaphore_mem>> -> memref<1x!tpu.dma_semaphore, #tpu.memory_space<semaphore_mem>>
      %119 = tpu.memref_squeeze %118 : memref<1x!tpu.dma_semaphore, #tpu.memory_space<semaphore_mem>> -> memref<!tpu.dma_semaphore, #tpu.memory_space<semaphore_mem>>
      tpu.enqueue_dma source(%115 : memref<1x128xf32, #tpu.memory_space<any>>) target(%117 : memref<1x128xf32, #tpu.memory_space<vmem>>) target_semaphore(%119 : memref<!tpu.dma_semaphore, #tpu.memory_space<semaphore_mem>>)
      %c2_i32_72 = arith.constant 2 : i32
      %120 = arith.addi %103, %c2_i32_72 : i32
      %121 = arith.index_cast %120 : i32 to index
      %122 = memref.load %arg1[%121] : memref<16xi32, #tpu.memory_space<smem>>
      %c0_i32_73 = arith.constant 0 : i32
      %123 = tpu.memref_slice %arg2[%122, %c0_i32_73] : memref<256x128xf32, #tpu.memory_space<any>> -> memref<1x128xf32, #tpu.memory_space<any>>
      %c2_i32_74 = arith.constant 2 : i32
      %c0_i32_75 = arith.constant 0 : i32
      %124 = tpu.memref_slice %arg4[%102, %c2_i32_74, %c0_i32_75] : memref<2x16x128xf32, #tpu.memory_space<vmem>> -> memref<1x1x128xf32, #tpu.memory_space<vmem>>
      %125 = tpu.memref_squeeze %124 : memref<1x1x128xf32, #tpu.memory_space<vmem>> -> memref<1x128xf32, #tpu.memory_space<vmem>>
      %126 = tpu.memref_slice %arg5[%102] : memref<2x!tpu.dma_semaphore, #tpu.memory_space<semaphore_mem>> -> memref<1x!tpu.dma_semaphore, #tpu.memory_space<semaphore_mem>>
      %127 = tpu.memref_squeeze %126 : memref<1x!tpu.dma_semaphore, #tpu.memory_space<semaphore_mem>> -> memref<!tpu.dma_semaphore, #tpu.memory_space<semaphore_mem>>
      tpu.enqueue_dma source(%123 : memref<1x128xf32, #tpu.memory_space<any>>) target(%125 : memref<1x128xf32, #tpu.memory_space<vmem>>) target_semaphore(%127 : memref<!tpu.dma_semaphore, #tpu.memory_space<semaphore_mem>>)
      %c3_i32_76 = arith.constant 3 : i32
      %128 = arith.addi %103, %c3_i32_76 : i32
      %129 = arith.index_cast %128 : i32 to index
      %130 = memref.load %arg1[%129] : memref<16xi32, #tpu.memory_space<smem>>
      %c0_i32_77 = arith.constant 0 : i32
      %131 = tpu.memref_slice %arg2[%130, %c0_i32_77] : memref<256x128xf32, #tpu.memory_space<any>> -> memref<1x128xf32, #tpu.memory_space<any>>
      %c3_i32_78 = arith.constant 3 : i32
      %c0_i32_79 = arith.constant 0 : i32
      %132 = tpu.memref_slice %arg4[%102, %c3_i32_78, %c0_i32_79] : memref<2x16x128xf32, #tpu.memory_space<vmem>> -> memref<1x1x128xf32, #tpu.memory_space<vmem>>
      %133 = tpu.memref_squeeze %132 : memref<1x1x128xf32, #tpu.memory_space<vmem>> -> memref<1x128xf32, #tpu.memory_space<vmem>>
      %134 = tpu.memref_slice %arg5[%102] : memref<2x!tpu.dma_semaphore, #tpu.memory_space<semaphore_mem>> -> memref<1x!tpu.dma_semaphore, #tpu.memory_space<semaphore_mem>>
      %135 = tpu.memref_squeeze %134 : memref<1x!tpu.dma_semaphore, #tpu.memory_space<semaphore_mem>> -> memref<!tpu.dma_semaphore, #tpu.memory_space<semaphore_mem>>
      tpu.enqueue_dma source(%131 : memref<1x128xf32, #tpu.memory_space<any>>) target(%133 : memref<1x128xf32, #tpu.memory_space<vmem>>) target_semaphore(%135 : memref<!tpu.dma_semaphore, #tpu.memory_space<semaphore_mem>>)
      %c4_i32_80 = arith.constant 4 : i32
      %136 = arith.addi %103, %c4_i32_80 : i32
      %137 = arith.index_cast %136 : i32 to index
      %138 = memref.load %arg1[%137] : memref<16xi32, #tpu.memory_space<smem>>
      %c0_i32_81 = arith.constant 0 : i32
      %139 = tpu.memref_slice %arg2[%138, %c0_i32_81] : memref<256x128xf32, #tpu.memory_space<any>> -> memref<1x128xf32, #tpu.memory_space<any>>
      %c4_i32_82 = arith.constant 4 : i32
      %c0_i32_83 = arith.constant 0 : i32
      %140 = tpu.memref_slice %arg4[%102, %c4_i32_82, %c0_i32_83] : memref<2x16x128xf32, #tpu.memory_space<vmem>> -> memref<1x1x128xf32, #tpu.memory_space<vmem>>
      %141 = tpu.memref_squeeze %140 : memref<1x1x128xf32, #tpu.memory_space<vmem>> -> memref<1x128xf32, #tpu.memory_space<vmem>>
      %142 = tpu.memref_slice %arg5[%102] : memref<2x!tpu.dma_semaphore, #tpu.memory_space<semaphore_mem>> -> memref<1x!tpu.dma_semaphore, #tpu.memory_space<semaphore_mem>>
      %143 = tpu.memref_squeeze %142 : memref<1x!tpu.dma_semaphore, #tpu.memory_space<semaphore_mem>> -> memref<!tpu.dma_semaphore, #tpu.memory_space<semaphore_mem>>
      tpu.enqueue_dma source(%139 : memref<1x128xf32, #tpu.memory_space<any>>) target(%141 : memref<1x128xf32, #tpu.memory_space<vmem>>) target_semaphore(%143 : memref<!tpu.dma_semaphore, #tpu.memory_space<semaphore_mem>>)
      %c5_i32_84 = arith.constant 5 : i32
      %144 = arith.addi %103, %c5_i32_84 : i32
      %145 = arith.index_cast %144 : i32 to index
      %146 = memref.load %arg1[%145] : memref<16xi32, #tpu.memory_space<smem>>
      %c0_i32_85 = arith.constant 0 : i32
      %147 = tpu.memref_slice %arg2[%146, %c0_i32_85] : memref<256x128xf32, #tpu.memory_space<any>> -> memref<1x128xf32, #tpu.memory_space<any>>
      %c5_i32_86 = arith.constant 5 : i32
      %c0_i32_87 = arith.constant 0 : i32
      %148 = tpu.memref_slice %arg4[%102, %c5_i32_86, %c0_i32_87] : memref<2x16x128xf32, #tpu.memory_space<vmem>> -> memref<1x1x128xf32, #tpu.memory_space<vmem>>
      %149 = tpu.memref_squeeze %148 : memref<1x1x128xf32, #tpu.memory_space<vmem>> -> memref<1x128xf32, #tpu.memory_space<vmem>>
      %150 = tpu.memref_slice %arg5[%102] : memref<2x!tpu.dma_semaphore, #tpu.memory_space<semaphore_mem>> -> memref<1x!tpu.dma_semaphore, #tpu.memory_space<semaphore_mem>>
      %151 = tpu.memref_squeeze %150 : memref<1x!tpu.dma_semaphore, #tpu.memory_space<semaphore_mem>> -> memref<!tpu.dma_semaphore, #tpu.memory_space<semaphore_mem>>
      tpu.enqueue_dma source(%147 : memref<1x128xf32, #tpu.memory_space<any>>) target(%149 : memref<1x128xf32, #tpu.memory_space<vmem>>) target_semaphore(%151 : memref<!tpu.dma_semaphore, #tpu.memory_space<semaphore_mem>>)
      %c6_i32_88 = arith.constant 6 : i32
      %152 = arith.addi %103, %c6_i32_88 : i32
      %153 = arith.index_cast %152 : i32 to index
      %154 = memref.load %arg1[%153] : memref<16xi32, #tpu.memory_space<smem>>
      %c0_i32_89 = arith.constant 0 : i32
      %155 = tpu.memref_slice %arg2[%154, %c0_i32_89] : memref<256x128xf32, #tpu.memory_space<any>> -> memref<1x128xf32, #tpu.memory_space<any>>
      %c6_i32_90 = arith.constant 6 : i32
      %c0_i32_91 = arith.constant 0 : i32
      %156 = tpu.memref_slice %arg4[%102, %c6_i32_90, %c0_i32_91] : memref<2x16x128xf32, #tpu.memory_space<vmem>> -> memref<1x1x128xf32, #tpu.memory_space<vmem>>
      %157 = tpu.memref_squeeze %156 : memref<1x1x128xf32, #tpu.memory_space<vmem>> -> memref<1x128xf32, #tpu.memory_space<vmem>>
      %158 = tpu.memref_slice %arg5[%102] : memref<2x!tpu.dma_semaphore, #tpu.memory_space<semaphore_mem>> -> memref<1x!tpu.dma_semaphore, #tpu.memory_space<semaphore_mem>>
      %159 = tpu.memref_squeeze %158 : memref<1x!tpu.dma_semaphore, #tpu.memory_space<semaphore_mem>> -> memref<!tpu.dma_semaphore, #tpu.memory_space<semaphore_mem>>
      tpu.enqueue_dma source(%155 : memref<1x128xf32, #tpu.memory_space<any>>) target(%157 : memref<1x128xf32, #tpu.memory_space<vmem>>) target_semaphore(%159 : memref<!tpu.dma_semaphore, #tpu.memory_space<semaphore_mem>>)
      %c7_i32_92 = arith.constant 7 : i32
      %160 = arith.addi %103, %c7_i32_92 : i32
      %161 = arith.index_cast %160 : i32 to index
      %162 = memref.load %arg1[%161] : memref<16xi32, #tpu.memory_space<smem>>
      %c0_i32_93 = arith.constant 0 : i32
      %163 = tpu.memref_slice %arg2[%162, %c0_i32_93] : memref<256x128xf32, #tpu.memory_space<any>> -> memref<1x128xf32, #tpu.memory_space<any>>
      %c7_i32_94 = arith.constant 7 : i32
      %c0_i32_95 = arith.constant 0 : i32
      %164 = tpu.memref_slice %arg4[%102, %c7_i32_94, %c0_i32_95] : memref<2x16x128xf32, #tpu.memory_space<vmem>> -> memref<1x1x128xf32, #tpu.memory_space<vmem>>
      %165 = tpu.memref_squeeze %164 : memref<1x1x128xf32, #tpu.memory_space<vmem>> -> memref<1x128xf32, #tpu.memory_space<vmem>>
      %166 = tpu.memref_slice %arg5[%102] : memref<2x!tpu.dma_semaphore, #tpu.memory_space<semaphore_mem>> -> memref<1x!tpu.dma_semaphore, #tpu.memory_space<semaphore_mem>>
      %167 = tpu.memref_squeeze %166 : memref<1x!tpu.dma_semaphore, #tpu.memory_space<semaphore_mem>> -> memref<!tpu.dma_semaphore, #tpu.memory_space<semaphore_mem>>
      tpu.enqueue_dma source(%163 : memref<1x128xf32, #tpu.memory_space<any>>) target(%165 : memref<1x128xf32, #tpu.memory_space<vmem>>) target_semaphore(%167 : memref<!tpu.dma_semaphore, #tpu.memory_space<semaphore_mem>>)
      %c8_i32_96 = arith.constant 8 : i32
      %168 = arith.addi %103, %c8_i32_96 : i32
      %169 = arith.index_cast %168 : i32 to index
      %170 = memref.load %arg1[%169] : memref<16xi32, #tpu.memory_space<smem>>
      %c0_i32_97 = arith.constant 0 : i32
      %171 = tpu.memref_slice %arg2[%170, %c0_i32_97] : memref<256x128xf32, #tpu.memory_space<any>> -> memref<1x128xf32, #tpu.memory_space<any>>
      %c8_i32_98 = arith.constant 8 : i32
      %c0_i32_99 = arith.constant 0 : i32
      %172 = tpu.memref_slice %arg4[%102, %c8_i32_98, %c0_i32_99] : memref<2x16x128xf32, #tpu.memory_space<vmem>> -> memref<1x1x128xf32, #tpu.memory_space<vmem>>
      %173 = tpu.memref_squeeze %172 : memref<1x1x128xf32, #tpu.memory_space<vmem>> -> memref<1x128xf32, #tpu.memory_space<vmem>>
      %174 = tpu.memref_slice %arg5[%102] : memref<2x!tpu.dma_semaphore, #tpu.memory_space<semaphore_mem>> -> memref<1x!tpu.dma_semaphore, #tpu.memory_space<semaphore_mem>>
      %175 = tpu.memref_squeeze %174 : memref<1x!tpu.dma_semaphore, #tpu.memory_space<semaphore_mem>> -> memref<!tpu.dma_semaphore, #tpu.memory_space<semaphore_mem>>
      tpu.enqueue_dma source(%171 : memref<1x128xf32, #tpu.memory_space<any>>) target(%173 : memref<1x128xf32, #tpu.memory_space<vmem>>) target_semaphore(%175 : memref<!tpu.dma_semaphore, #tpu.memory_space<semaphore_mem>>)
      %c9_i32_100 = arith.constant 9 : i32
      %176 = arith.addi %103, %c9_i32_100 : i32
      %177 = arith.index_cast %176 : i32 to index
      %178 = memref.load %arg1[%177] : memref<16xi32, #tpu.memory_space<smem>>
      %c0_i32_101 = arith.constant 0 : i32
      %179 = tpu.memref_slice %arg2[%178, %c0_i32_101] : memref<256x128xf32, #tpu.memory_space<any>> -> memref<1x128xf32, #tpu.memory_space<any>>
      %c9_i32_102 = arith.constant 9 : i32
      %c0_i32_103 = arith.constant 0 : i32
      %180 = tpu.memref_slice %arg4[%102, %c9_i32_102, %c0_i32_103] : memref<2x16x128xf32, #tpu.memory_space<vmem>> -> memref<1x1x128xf32, #tpu.memory_space<vmem>>
      %181 = tpu.memref_squeeze %180 : memref<1x1x128xf32, #tpu.memory_space<vmem>> -> memref<1x128xf32, #tpu.memory_space<vmem>>
      %182 = tpu.memref_slice %arg5[%102] : memref<2x!tpu.dma_semaphore, #tpu.memory_space<semaphore_mem>> -> memref<1x!tpu.dma_semaphore, #tpu.memory_space<semaphore_mem>>
      %183 = tpu.memref_squeeze %182 : memref<1x!tpu.dma_semaphore, #tpu.memory_space<semaphore_mem>> -> memref<!tpu.dma_semaphore, #tpu.memory_space<semaphore_mem>>
      tpu.enqueue_dma source(%179 : memref<1x128xf32, #tpu.memory_space<any>>) target(%181 : memref<1x128xf32, #tpu.memory_space<vmem>>) target_semaphore(%183 : memref<!tpu.dma_semaphore, #tpu.memory_space<semaphore_mem>>)
      %c10_i32_104 = arith.constant 10 : i32
      %184 = arith.addi %103, %c10_i32_104 : i32
      %185 = arith.index_cast %184 : i32 to index
      %186 = memref.load %arg1[%185] : memref<16xi32, #tpu.memory_space<smem>>
      %c0_i32_105 = arith.constant 0 : i32
      %187 = tpu.memref_slice %arg2[%186, %c0_i32_105] : memref<256x128xf32, #tpu.memory_space<any>> -> memref<1x128xf32, #tpu.memory_space<any>>
      %c10_i32_106 = arith.constant 10 : i32
      %c0_i32_107 = arith.constant 0 : i32
      %188 = tpu.memref_slice %arg4[%102, %c10_i32_106, %c0_i32_107] : memref<2x16x128xf32, #tpu.memory_space<vmem>> -> memref<1x1x128xf32, #tpu.memory_space<vmem>>
      %189 = tpu.memref_squeeze %188 : memref<1x1x128xf32, #tpu.memory_space<vmem>> -> memref<1x128xf32, #tpu.memory_space<vmem>>
      %190 = tpu.memref_slice %arg5[%102] : memref<2x!tpu.dma_semaphore, #tpu.memory_space<semaphore_mem>> -> memref<1x!tpu.dma_semaphore, #tpu.memory_space<semaphore_mem>>
      %191 = tpu.memref_squeeze %190 : memref<1x!tpu.dma_semaphore, #tpu.memory_space<semaphore_mem>> -> memref<!tpu.dma_semaphore, #tpu.memory_space<semaphore_mem>>
      tpu.enqueue_dma source(%187 : memref<1x128xf32, #tpu.memory_space<any>>) target(%189 : memref<1x128xf32, #tpu.memory_space<vmem>>) target_semaphore(%191 : memref<!tpu.dma_semaphore, #tpu.memory_space<semaphore_mem>>)
      %c11_i32_108 = arith.constant 11 : i32
      %192 = arith.addi %103, %c11_i32_108 : i32
      %193 = arith.index_cast %192 : i32 to index
      %194 = memref.load %arg1[%193] : memref<16xi32, #tpu.memory_space<smem>>
      %c0_i32_109 = arith.constant 0 : i32
      %195 = tpu.memref_slice %arg2[%194, %c0_i32_109] : memref<256x128xf32, #tpu.memory_space<any>> -> memref<1x128xf32, #tpu.memory_space<any>>
      %c11_i32_110 = arith.constant 11 : i32
      %c0_i32_111 = arith.constant 0 : i32
      %196 = tpu.memref_slice %arg4[%102, %c11_i32_110, %c0_i32_111] : memref<2x16x128xf32, #tpu.memory_space<vmem>> -> memref<1x1x128xf32, #tpu.memory_space<vmem>>
      %197 = tpu.memref_squeeze %196 : memref<1x1x128xf32, #tpu.memory_space<vmem>> -> memref<1x128xf32, #tpu.memory_space<vmem>>
      %198 = tpu.memref_slice %arg5[%102] : memref<2x!tpu.dma_semaphore, #tpu.memory_space<semaphore_mem>> -> memref<1x!tpu.dma_semaphore, #tpu.memory_space<semaphore_mem>>
      %199 = tpu.memref_squeeze %198 : memref<1x!tpu.dma_semaphore, #tpu.memory_space<semaphore_mem>> -> memref<!tpu.dma_semaphore, #tpu.memory_space<semaphore_mem>>
      tpu.enqueue_dma source(%195 : memref<1x128xf32, #tpu.memory_space<any>>) target(%197 : memref<1x128xf32, #tpu.memory_space<vmem>>) target_semaphore(%199 : memref<!tpu.dma_semaphore, #tpu.memory_space<semaphore_mem>>)
      %c12_i32_112 = arith.constant 12 : i32
      %200 = arith.addi %103, %c12_i32_112 : i32
      %201 = arith.index_cast %200 : i32 to index
      %202 = memref.load %arg1[%201] : memref<16xi32, #tpu.memory_space<smem>>
      %c0_i32_113 = arith.constant 0 : i32
      %203 = tpu.memref_slice %arg2[%202, %c0_i32_113] : memref<256x128xf32, #tpu.memory_space<any>> -> memref<1x128xf32, #tpu.memory_space<any>>
      %c12_i32_114 = arith.constant 12 : i32
      %c0_i32_115 = arith.constant 0 : i32
      %204 = tpu.memref_slice %arg4[%102, %c12_i32_114, %c0_i32_115] : memref<2x16x128xf32, #tpu.memory_space<vmem>> -> memref<1x1x128xf32, #tpu.memory_space<vmem>>
      %205 = tpu.memref_squeeze %204 : memref<1x1x128xf32, #tpu.memory_space<vmem>> -> memref<1x128xf32, #tpu.memory_space<vmem>>
      %206 = tpu.memref_slice %arg5[%102] : memref<2x!tpu.dma_semaphore, #tpu.memory_space<semaphore_mem>> -> memref<1x!tpu.dma_semaphore, #tpu.memory_space<semaphore_mem>>
      %207 = tpu.memref_squeeze %206 : memref<1x!tpu.dma_semaphore, #tpu.memory_space<semaphore_mem>> -> memref<!tpu.dma_semaphore, #tpu.memory_space<semaphore_mem>>
      tpu.enqueue_dma source(%203 : memref<1x128xf32, #tpu.memory_space<any>>) target(%205 : memref<1x128xf32, #tpu.memory_space<vmem>>) target_semaphore(%207 : memref<!tpu.dma_semaphore, #tpu.memory_space<semaphore_mem>>)
      %c13_i32_116 = arith.constant 13 : i32
      %208 = arith.addi %103, %c13_i32_116 : i32
      %209 = arith.index_cast %208 : i32 to index
      %210 = memref.load %arg1[%209] : memref<16xi32, #tpu.memory_space<smem>>
      %c0_i32_117 = arith.constant 0 : i32
      %211 = tpu.memref_slice %arg2[%210, %c0_i32_117] : memref<256x128xf32, #tpu.memory_space<any>> -> memref<1x128xf32, #tpu.memory_space<any>>
      %c13_i32_118 = arith.constant 13 : i32
      %c0_i32_119 = arith.constant 0 : i32
      %212 = tpu.memref_slice %arg4[%102, %c13_i32_118, %c0_i32_119] : memref<2x16x128xf32, #tpu.memory_space<vmem>> -> memref<1x1x128xf32, #tpu.memory_space<vmem>>
      %213 = tpu.memref_squeeze %212 : memref<1x1x128xf32, #tpu.memory_space<vmem>> -> memref<1x128xf32, #tpu.memory_space<vmem>>
      %214 = tpu.memref_slice %arg5[%102] : memref<2x!tpu.dma_semaphore, #tpu.memory_space<semaphore_mem>> -> memref<1x!tpu.dma_semaphore, #tpu.memory_space<semaphore_mem>>
      %215 = tpu.memref_squeeze %214 : memref<1x!tpu.dma_semaphore, #tpu.memory_space<semaphore_mem>> -> memref<!tpu.dma_semaphore, #tpu.memory_space<semaphore_mem>>
      tpu.enqueue_dma source(%211 : memref<1x128xf32, #tpu.memory_space<any>>) target(%213 : memref<1x128xf32, #tpu.memory_space<vmem>>) target_semaphore(%215 : memref<!tpu.dma_semaphore, #tpu.memory_space<semaphore_mem>>)
      %c14_i32_120 = arith.constant 14 : i32
      %216 = arith.addi %103, %c14_i32_120 : i32
      %217 = arith.index_cast %216 : i32 to index
      %218 = memref.load %arg1[%217] : memref<16xi32, #tpu.memory_space<smem>>
      %c0_i32_121 = arith.constant 0 : i32
      %219 = tpu.memref_slice %arg2[%218, %c0_i32_121] : memref<256x128xf32, #tpu.memory_space<any>> -> memref<1x128xf32, #tpu.memory_space<any>>
      %c14_i32_122 = arith.constant 14 : i32
      %c0_i32_123 = arith.constant 0 : i32
      %220 = tpu.memref_slice %arg4[%102, %c14_i32_122, %c0_i32_123] : memref<2x16x128xf32, #tpu.memory_space<vmem>> -> memref<1x1x128xf32, #tpu.memory_space<vmem>>
      %221 = tpu.memref_squeeze %220 : memref<1x1x128xf32, #tpu.memory_space<vmem>> -> memref<1x128xf32, #tpu.memory_space<vmem>>
      %222 = tpu.memref_slice %arg5[%102] : memref<2x!tpu.dma_semaphore, #tpu.memory_space<semaphore_mem>> -> memref<1x!tpu.dma_semaphore, #tpu.memory_space<semaphore_mem>>
      %223 = tpu.memref_squeeze %222 : memref<1x!tpu.dma_semaphore, #tpu.memory_space<semaphore_mem>> -> memref<!tpu.dma_semaphore, #tpu.memory_space<semaphore_mem>>
      tpu.enqueue_dma source(%219 : memref<1x128xf32, #tpu.memory_space<any>>) target(%221 : memref<1x128xf32, #tpu.memory_space<vmem>>) target_semaphore(%223 : memref<!tpu.dma_semaphore, #tpu.memory_space<semaphore_mem>>)
      %c15_i32_124 = arith.constant 15 : i32
      %224 = arith.addi %103, %c15_i32_124 : i32
      %225 = arith.index_cast %224 : i32 to index
      %226 = memref.load %arg1[%225] : memref<16xi32, #tpu.memory_space<smem>>
      %c0_i32_125 = arith.constant 0 : i32
      %227 = tpu.memref_slice %arg2[%226, %c0_i32_125] : memref<256x128xf32, #tpu.memory_space<any>> -> memref<1x128xf32, #tpu.memory_space<any>>
      %c15_i32_126 = arith.constant 15 : i32
      %c0_i32_127 = arith.constant 0 : i32
      %228 = tpu.memref_slice %arg4[%102, %c15_i32_126, %c0_i32_127] : memref<2x16x128xf32, #tpu.memory_space<vmem>> -> memref<1x1x128xf32, #tpu.memory_space<vmem>>
      %229 = tpu.memref_squeeze %228 : memref<1x1x128xf32, #tpu.memory_space<vmem>> -> memref<1x128xf32, #tpu.memory_space<vmem>>
      %230 = tpu.memref_slice %arg5[%102] : memref<2x!tpu.dma_semaphore, #tpu.memory_space<semaphore_mem>> -> memref<1x!tpu.dma_semaphore, #tpu.memory_space<semaphore_mem>>
      %231 = tpu.memref_squeeze %230 : memref<1x!tpu.dma_semaphore, #tpu.memory_space<semaphore_mem>> -> memref<!tpu.dma_semaphore, #tpu.memory_space<semaphore_mem>>
      tpu.enqueue_dma source(%227 : memref<1x128xf32, #tpu.memory_space<any>>) target(%229 : memref<1x128xf32, #tpu.memory_space<vmem>>) target_semaphore(%231 : memref<!tpu.dma_semaphore, #tpu.memory_space<semaphore_mem>>)
    } else {
    }
    %c0_i32_8 = arith.constant 0 : i32
    %c0_i32_9 = arith.constant 0 : i32
    %17 = tpu.memref_slice %arg2[%c0_i32_8, %c0_i32_9] : memref<256x128xf32, #tpu.memory_space<any>> -> memref<1x128xf32, #tpu.memory_space<any>>
    %c0_i32_10 = arith.constant 0 : i32
    %c0_i32_11 = arith.constant 0 : i32
    %18 = tpu.memref_slice %arg4[%9, %c0_i32_10, %c0_i32_11] : memref<2x16x128xf32, #tpu.memory_space<vmem>> -> memref<1x1x128xf32, #tpu.memory_space<vmem>>
    %19 = tpu.memref_squeeze %18 : memref<1x1x128xf32, #tpu.memory_space<vmem>> -> memref<1x128xf32, #tpu.memory_space<vmem>>
    %20 = tpu.memref_slice %arg5[%9] : memref<2x!tpu.dma_semaphore, #tpu.memory_space<semaphore_mem>> -> memref<1x!tpu.dma_semaphore, #tpu.memory_space<semaphore_mem>>
    %21 = tpu.memref_squeeze %20 : memref<1x!tpu.dma_semaphore, #tpu.memory_space<semaphore_mem>> -> memref<!tpu.dma_semaphore, #tpu.memory_space<semaphore_mem>>
    tpu.wait_dma2 semaphore(%21 : memref<!tpu.dma_semaphore, #tpu.memory_space<semaphore_mem>>) src(%17 : memref<1x128xf32, #tpu.memory_space<any>>) dst(%19 : memref<1x128xf32, #tpu.memory_space<vmem>>)
    %c0_i32_12 = arith.constant 0 : i32
    %c0_i32_13 = arith.constant 0 : i32
    %22 = tpu.memref_slice %arg2[%c0_i32_12, %c0_i32_13] : memref<256x128xf32, #tpu.memory_space<any>> -> memref<1x128xf32, #tpu.memory_space<any>>
    %c1_i32_14 = arith.constant 1 : i32
    %c0_i32_15 = arith.constant 0 : i32
    %23 = tpu.memref_slice %arg4[%9, %c1_i32_14, %c0_i32_15] : memref<2x16x128xf32, #tpu.memory_space<vmem>> -> memref<1x1x128xf32, #tpu.memory_space<vmem>>
    %24 = tpu.memref_squeeze %23 : memref<1x1x128xf32, #tpu.memory_space<vmem>> -> memref<1x128xf32, #tpu.memory_space<vmem>>
    %25 = tpu.memref_slice %arg5[%9] : memref<2x!tpu.dma_semaphore, #tpu.memory_space<semaphore_mem>> -> memref<1x!tpu.dma_semaphore, #tpu.memory_space<semaphore_mem>>
    %26 = tpu.memref_squeeze %25 : memref<1x!tpu.dma_semaphore, #tpu.memory_space<semaphore_mem>> -> memref<!tpu.dma_semaphore, #tpu.memory_space<semaphore_mem>>
    tpu.wait_dma2 semaphore(%26 : memref<!tpu.dma_semaphore, #tpu.memory_space<semaphore_mem>>) src(%22 : memref<1x128xf32, #tpu.memory_space<any>>) dst(%24 : memref<1x128xf32, #tpu.memory_space<vmem>>)
    %c0_i32_16 = arith.constant 0 : i32
    %c0_i32_17 = arith.constant 0 : i32
    %27 = tpu.memref_slice %arg2[%c0_i32_16, %c0_i32_17] : memref<256x128xf32, #tpu.memory_space<any>> -> memref<1x128xf32, #tpu.memory_space<any>>
    %c2_i32_18 = arith.constant 2 : i32
    %c0_i32_19 = arith.constant 0 : i32
    %28 = tpu.memref_slice %arg4[%9, %c2_i32_18, %c0_i32_19] : memref<2x16x128xf32, #tpu.memory_space<vmem>> -> memref<1x1x128xf32, #tpu.memory_space<vmem>>
    %29 = tpu.memref_squeeze %28 : memref<1x1x128xf32, #tpu.memory_space<vmem>> -> memref<1x128xf32, #tpu.memory_space<vmem>>
    %30 = tpu.memref_slice %arg5[%9] : memref<2x!tpu.dma_semaphore, #tpu.memory_space<semaphore_mem>> -> memref<1x!tpu.dma_semaphore, #tpu.memory_space<semaphore_mem>>
    %31 = tpu.memref_squeeze %30 : memref<1x!tpu.dma_semaphore, #tpu.memory_space<semaphore_mem>> -> memref<!tpu.dma_semaphore, #tpu.memory_space<semaphore_mem>>
    tpu.wait_dma2 semaphore(%31 : memref<!tpu.dma_semaphore, #tpu.memory_space<semaphore_mem>>) src(%27 : memref<1x128xf32, #tpu.memory_space<any>>) dst(%29 : memref<1x128xf32, #tpu.memory_space<vmem>>)
    %c0_i32_20 = arith.constant 0 : i32
    %c0_i32_21 = arith.constant 0 : i32
    %32 = tpu.memref_slice %arg2[%c0_i32_20, %c0_i32_21] : memref<256x128xf32, #tpu.memory_space<any>> -> memref<1x128xf32, #tpu.memory_space<any>>
    %c3_i32 = arith.constant 3 : i32
    %c0_i32_22 = arith.constant 0 : i32
    %33 = tpu.memref_slice %arg4[%9, %c3_i32, %c0_i32_22] : memref<2x16x128xf32, #tpu.memory_space<vmem>> -> memref<1x1x128xf32, #tpu.memory_space<vmem>>
    %34 = tpu.memref_squeeze %33 : memref<1x1x128xf32, #tpu.memory_space<vmem>> -> memref<1x128xf32, #tpu.memory_space<vmem>>
    %35 = tpu.memref_slice %arg5[%9] : memref<2x!tpu.dma_semaphore, #tpu.memory_space<semaphore_mem>> -> memref<1x!tpu.dma_semaphore, #tpu.memory_space<semaphore_mem>>
    %36 = tpu.memref_squeeze %35 : memref<1x!tpu.dma_semaphore, #tpu.memory_space<semaphore_mem>> -> memref<!tpu.dma_semaphore, #tpu.memory_space<semaphore_mem>>
    tpu.wait_dma2 semaphore(%36 : memref<!tpu.dma_semaphore, #tpu.memory_space<semaphore_mem>>) src(%32 : memref<1x128xf32, #tpu.memory_space<any>>) dst(%34 : memref<1x128xf32, #tpu.memory_space<vmem>>)
    %c0_i32_23 = arith.constant 0 : i32
    %c0_i32_24 = arith.constant 0 : i32
    %37 = tpu.memref_slice %arg2[%c0_i32_23, %c0_i32_24] : memref<256x128xf32, #tpu.memory_space<any>> -> memref<1x128xf32, #tpu.memory_space<any>>
    %c4_i32 = arith.constant 4 : i32
    %c0_i32_25 = arith.constant 0 : i32
    %38 = tpu.memref_slice %arg4[%9, %c4_i32, %c0_i32_25] : memref<2x16x128xf32, #tpu.memory_space<vmem>> -> memref<1x1x128xf32, #tpu.memory_space<vmem>>
    %39 = tpu.memref_squeeze %38 : memref<1x1x128xf32, #tpu.memory_space<vmem>> -> memref<1x128xf32, #tpu.memory_space<vmem>>
    %40 = tpu.memref_slice %arg5[%9] : memref<2x!tpu.dma_semaphore, #tpu.memory_space<semaphore_mem>> -> memref<1x!tpu.dma_semaphore, #tpu.memory_space<semaphore_mem>>
    %41 = tpu.memref_squeeze %40 : memref<1x!tpu.dma_semaphore, #tpu.memory_space<semaphore_mem>> -> memref<!tpu.dma_semaphore, #tpu.memory_space<semaphore_mem>>
    tpu.wait_dma2 semaphore(%41 : memref<!tpu.dma_semaphore, #tpu.memory_space<semaphore_mem>>) src(%37 : memref<1x128xf32, #tpu.memory_space<any>>) dst(%39 : memref<1x128xf32, #tpu.memory_space<vmem>>)
    %c0_i32_26 = arith.constant 0 : i32
    %c0_i32_27 = arith.constant 0 : i32
    %42 = tpu.memref_slice %arg2[%c0_i32_26, %c0_i32_27] : memref<256x128xf32, #tpu.memory_space<any>> -> memref<1x128xf32, #tpu.memory_space<any>>
    %c5_i32 = arith.constant 5 : i32
    %c0_i32_28 = arith.constant 0 : i32
    %43 = tpu.memref_slice %arg4[%9, %c5_i32, %c0_i32_28] : memref<2x16x128xf32, #tpu.memory_space<vmem>> -> memref<1x1x128xf32, #tpu.memory_space<vmem>>
    %44 = tpu.memref_squeeze %43 : memref<1x1x128xf32, #tpu.memory_space<vmem>> -> memref<1x128xf32, #tpu.memory_space<vmem>>
    %45 = tpu.memref_slice %arg5[%9] : memref<2x!tpu.dma_semaphore, #tpu.memory_space<semaphore_mem>> -> memref<1x!tpu.dma_semaphore, #tpu.memory_space<semaphore_mem>>
    %46 = tpu.memref_squeeze %45 : memref<1x!tpu.dma_semaphore, #tpu.memory_space<semaphore_mem>> -> memref<!tpu.dma_semaphore, #tpu.memory_space<semaphore_mem>>
    tpu.wait_dma2 semaphore(%46 : memref<!tpu.dma_semaphore, #tpu.memory_space<semaphore_mem>>) src(%42 : memref<1x128xf32, #tpu.memory_space<any>>) dst(%44 : memref<1x128xf32, #tpu.memory_space<vmem>>)
    %c0_i32_29 = arith.constant 0 : i32
    %c0_i32_30 = arith.constant 0 : i32
    %47 = tpu.memref_slice %arg2[%c0_i32_29, %c0_i32_30] : memref<256x128xf32, #tpu.memory_space<any>> -> memref<1x128xf32, #tpu.memory_space<any>>
    %c6_i32 = arith.constant 6 : i32
    %c0_i32_31 = arith.constant 0 : i32
    %48 = tpu.memref_slice %arg4[%9, %c6_i32, %c0_i32_31] : memref<2x16x128xf32, #tpu.memory_space<vmem>> -> memref<1x1x128xf32, #tpu.memory_space<vmem>>
    %49 = tpu.memref_squeeze %48 : memref<1x1x128xf32, #tpu.memory_space<vmem>> -> memref<1x128xf32, #tpu.memory_space<vmem>>
    %50 = tpu.memref_slice %arg5[%9] : memref<2x!tpu.dma_semaphore, #tpu.memory_space<semaphore_mem>> -> memref<1x!tpu.dma_semaphore, #tpu.memory_space<semaphore_mem>>
    %51 = tpu.memref_squeeze %50 : memref<1x!tpu.dma_semaphore, #tpu.memory_space<semaphore_mem>> -> memref<!tpu.dma_semaphore, #tpu.memory_space<semaphore_mem>>
    tpu.wait_dma2 semaphore(%51 : memref<!tpu.dma_semaphore, #tpu.memory_space<semaphore_mem>>) src(%47 : memref<1x128xf32, #tpu.memory_space<any>>) dst(%49 : memref<1x128xf32, #tpu.memory_space<vmem>>)
    %c0_i32_32 = arith.constant 0 : i32
    %c0_i32_33 = arith.constant 0 : i32
    %52 = tpu.memref_slice %arg2[%c0_i32_32, %c0_i32_33] : memref<256x128xf32, #tpu.memory_space<any>> -> memref<1x128xf32, #tpu.memory_space<any>>
    %c7_i32 = arith.constant 7 : i32
    %c0_i32_34 = arith.constant 0 : i32
    %53 = tpu.memref_slice %arg4[%9, %c7_i32, %c0_i32_34] : memref<2x16x128xf32, #tpu.memory_space<vmem>> -> memref<1x1x128xf32, #tpu.memory_space<vmem>>
    %54 = tpu.memref_squeeze %53 : memref<1x1x128xf32, #tpu.memory_space<vmem>> -> memref<1x128xf32, #tpu.memory_space<vmem>>
    %55 = tpu.memref_slice %arg5[%9] : memref<2x!tpu.dma_semaphore, #tpu.memory_space<semaphore_mem>> -> memref<1x!tpu.dma_semaphore, #tpu.memory_space<semaphore_mem>>
    %56 = tpu.memref_squeeze %55 : memref<1x!tpu.dma_semaphore, #tpu.memory_space<semaphore_mem>> -> memref<!tpu.dma_semaphore, #tpu.memory_space<semaphore_mem>>
    tpu.wait_dma2 semaphore(%56 : memref<!tpu.dma_semaphore, #tpu.memory_space<semaphore_mem>>) src(%52 : memref<1x128xf32, #tpu.memory_space<any>>) dst(%54 : memref<1x128xf32, #tpu.memory_space<vmem>>)
    %c0_i32_35 = arith.constant 0 : i32
    %c0_i32_36 = arith.constant 0 : i32
    %57 = tpu.memref_slice %arg2[%c0_i32_35, %c0_i32_36] : memref<256x128xf32, #tpu.memory_space<any>> -> memref<1x128xf32, #tpu.memory_space<any>>
    %c8_i32 = arith.constant 8 : i32
    %c0_i32_37 = arith.constant 0 : i32
    %58 = tpu.memref_slice %arg4[%9, %c8_i32, %c0_i32_37] : memref<2x16x128xf32, #tpu.memory_space<vmem>> -> memref<1x1x128xf32, #tpu.memory_space<vmem>>
    %59 = tpu.memref_squeeze %58 : memref<1x1x128xf32, #tpu.memory_space<vmem>> -> memref<1x128xf32, #tpu.memory_space<vmem>>
    %60 = tpu.memref_slice %arg5[%9] : memref<2x!tpu.dma_semaphore, #tpu.memory_space<semaphore_mem>> -> memref<1x!tpu.dma_semaphore, #tpu.memory_space<semaphore_mem>>
    %61 = tpu.memref_squeeze %60 : memref<1x!tpu.dma_semaphore, #tpu.memory_space<semaphore_mem>> -> memref<!tpu.dma_semaphore, #tpu.memory_space<semaphore_mem>>
    tpu.wait_dma2 semaphore(%61 : memref<!tpu.dma_semaphore, #tpu.memory_space<semaphore_mem>>) src(%57 : memref<1x128xf32, #tpu.memory_space<any>>) dst(%59 : memref<1x128xf32, #tpu.memory_space<vmem>>)
    %c0_i32_38 = arith.constant 0 : i32
    %c0_i32_39 = arith.constant 0 : i32
    %62 = tpu.memref_slice %arg2[%c0_i32_38, %c0_i32_39] : memref<256x128xf32, #tpu.memory_space<any>> -> memref<1x128xf32, #tpu.memory_space<any>>
    %c9_i32 = arith.constant 9 : i32
    %c0_i32_40 = arith.constant 0 : i32
    %63 = tpu.memref_slice %arg4[%9, %c9_i32, %c0_i32_40] : memref<2x16x128xf32, #tpu.memory_space<vmem>> -> memref<1x1x128xf32, #tpu.memory_space<vmem>>
    %64 = tpu.memref_squeeze %63 : memref<1x1x128xf32, #tpu.memory_space<vmem>> -> memref<1x128xf32, #tpu.memory_space<vmem>>
    %65 = tpu.memref_slice %arg5[%9] : memref<2x!tpu.dma_semaphore, #tpu.memory_space<semaphore_mem>> -> memref<1x!tpu.dma_semaphore, #tpu.memory_space<semaphore_mem>>
    %66 = tpu.memref_squeeze %65 : memref<1x!tpu.dma_semaphore, #tpu.memory_space<semaphore_mem>> -> memref<!tpu.dma_semaphore, #tpu.memory_space<semaphore_mem>>
    tpu.wait_dma2 semaphore(%66 : memref<!tpu.dma_semaphore, #tpu.memory_space<semaphore_mem>>) src(%62 : memref<1x128xf32, #tpu.memory_space<any>>) dst(%64 : memref<1x128xf32, #tpu.memory_space<vmem>>)
    %c0_i32_41 = arith.constant 0 : i32
    %c0_i32_42 = arith.constant 0 : i32
    %67 = tpu.memref_slice %arg2[%c0_i32_41, %c0_i32_42] : memref<256x128xf32, #tpu.memory_space<any>> -> memref<1x128xf32, #tpu.memory_space<any>>
    %c10_i32 = arith.constant 10 : i32
    %c0_i32_43 = arith.constant 0 : i32
    %68 = tpu.memref_slice %arg4[%9, %c10_i32, %c0_i32_43] : memref<2x16x128xf32, #tpu.memory_space<vmem>> -> memref<1x1x128xf32, #tpu.memory_space<vmem>>
    %69 = tpu.memref_squeeze %68 : memref<1x1x128xf32, #tpu.memory_space<vmem>> -> memref<1x128xf32, #tpu.memory_space<vmem>>
    %70 = tpu.memref_slice %arg5[%9] : memref<2x!tpu.dma_semaphore, #tpu.memory_space<semaphore_mem>> -> memref<1x!tpu.dma_semaphore, #tpu.memory_space<semaphore_mem>>
    %71 = tpu.memref_squeeze %70 : memref<1x!tpu.dma_semaphore, #tpu.memory_space<semaphore_mem>> -> memref<!tpu.dma_semaphore, #tpu.memory_space<semaphore_mem>>
    tpu.wait_dma2 semaphore(%71 : memref<!tpu.dma_semaphore, #tpu.memory_space<semaphore_mem>>) src(%67 : memref<1x128xf32, #tpu.memory_space<any>>) dst(%69 : memref<1x128xf32, #tpu.memory_space<vmem>>)
    %c0_i32_44 = arith.constant 0 : i32
    %c0_i32_45 = arith.constant 0 : i32
    %72 = tpu.memref_slice %arg2[%c0_i32_44, %c0_i32_45] : memref<256x128xf32, #tpu.memory_space<any>> -> memref<1x128xf32, #tpu.memory_space<any>>
    %c11_i32 = arith.constant 11 : i32
    %c0_i32_46 = arith.constant 0 : i32
    %73 = tpu.memref_slice %arg4[%9, %c11_i32, %c0_i32_46] : memref<2x16x128xf32, #tpu.memory_space<vmem>> -> memref<1x1x128xf32, #tpu.memory_space<vmem>>
    %74 = tpu.memref_squeeze %73 : memref<1x1x128xf32, #tpu.memory_space<vmem>> -> memref<1x128xf32, #tpu.memory_space<vmem>>
    %75 = tpu.memref_slice %arg5[%9] : memref<2x!tpu.dma_semaphore, #tpu.memory_space<semaphore_mem>> -> memref<1x!tpu.dma_semaphore, #tpu.memory_space<semaphore_mem>>
    %76 = tpu.memref_squeeze %75 : memref<1x!tpu.dma_semaphore, #tpu.memory_space<semaphore_mem>> -> memref<!tpu.dma_semaphore, #tpu.memory_space<semaphore_mem>>
    tpu.wait_dma2 semaphore(%76 : memref<!tpu.dma_semaphore, #tpu.memory_space<semaphore_mem>>) src(%72 : memref<1x128xf32, #tpu.memory_space<any>>) dst(%74 : memref<1x128xf32, #tpu.memory_space<vmem>>)
    %c0_i32_47 = arith.constant 0 : i32
    %c0_i32_48 = arith.constant 0 : i32
    %77 = tpu.memref_slice %arg2[%c0_i32_47, %c0_i32_48] : memref<256x128xf32, #tpu.memory_space<any>> -> memref<1x128xf32, #tpu.memory_space<any>>
    %c12_i32 = arith.constant 12 : i32
    %c0_i32_49 = arith.constant 0 : i32
    %78 = tpu.memref_slice %arg4[%9, %c12_i32, %c0_i32_49] : memref<2x16x128xf32, #tpu.memory_space<vmem>> -> memref<1x1x128xf32, #tpu.memory_space<vmem>>
    %79 = tpu.memref_squeeze %78 : memref<1x1x128xf32, #tpu.memory_space<vmem>> -> memref<1x128xf32, #tpu.memory_space<vmem>>
    %80 = tpu.memref_slice %arg5[%9] : memref<2x!tpu.dma_semaphore, #tpu.memory_space<semaphore_mem>> -> memref<1x!tpu.dma_semaphore, #tpu.memory_space<semaphore_mem>>
    %81 = tpu.memref_squeeze %80 : memref<1x!tpu.dma_semaphore, #tpu.memory_space<semaphore_mem>> -> memref<!tpu.dma_semaphore, #tpu.memory_space<semaphore_mem>>
    tpu.wait_dma2 semaphore(%81 : memref<!tpu.dma_semaphore, #tpu.memory_space<semaphore_mem>>) src(%77 : memref<1x128xf32, #tpu.memory_space<any>>) dst(%79 : memref<1x128xf32, #tpu.memory_space<vmem>>)
    %c0_i32_50 = arith.constant 0 : i32
    %c0_i32_51 = arith.constant 0 : i32
    %82 = tpu.memref_slice %arg2[%c0_i32_50, %c0_i32_51] : memref<256x128xf32, #tpu.memory_space<any>> -> memref<1x128xf32, #tpu.memory_space<any>>
    %c13_i32 = arith.constant 13 : i32
    %c0_i32_52 = arith.constant 0 : i32
    %83 = tpu.memref_slice %arg4[%9, %c13_i32, %c0_i32_52] : memref<2x16x128xf32, #tpu.memory_space<vmem>> -> memref<1x1x128xf32, #tpu.memory_space<vmem>>
    %84 = tpu.memref_squeeze %83 : memref<1x1x128xf32, #tpu.memory_space<vmem>> -> memref<1x128xf32, #tpu.memory_space<vmem>>
    %85 = tpu.memref_slice %arg5[%9] : memref<2x!tpu.dma_semaphore, #tpu.memory_space<semaphore_mem>> -> memref<1x!tpu.dma_semaphore, #tpu.memory_space<semaphore_mem>>
    %86 = tpu.memref_squeeze %85 : memref<1x!tpu.dma_semaphore, #tpu.memory_space<semaphore_mem>> -> memref<!tpu.dma_semaphore, #tpu.memory_space<semaphore_mem>>
    tpu.wait_dma2 semaphore(%86 : memref<!tpu.dma_semaphore, #tpu.memory_space<semaphore_mem>>) src(%82 : memref<1x128xf32, #tpu.memory_space<any>>) dst(%84 : memref<1x128xf32, #tpu.memory_space<vmem>>)
    %c0_i32_53 = arith.constant 0 : i32
    %c0_i32_54 = arith.constant 0 : i32
    %87 = tpu.memref_slice %arg2[%c0_i32_53, %c0_i32_54] : memref<256x128xf32, #tpu.memory_space<any>> -> memref<1x128xf32, #tpu.memory_space<any>>
    %c14_i32 = arith.constant 14 : i32
    %c0_i32_55 = arith.constant 0 : i32
    %88 = tpu.memref_slice %arg4[%9, %c14_i32, %c0_i32_55] : memref<2x16x128xf32, #tpu.memory_space<vmem>> -> memref<1x1x128xf32, #tpu.memory_space<vmem>>
    %89 = tpu.memref_squeeze %88 : memref<1x1x128xf32, #tpu.memory_space<vmem>> -> memref<1x128xf32, #tpu.memory_space<vmem>>
    %90 = tpu.memref_slice %arg5[%9] : memref<2x!tpu.dma_semaphore, #tpu.memory_space<semaphore_mem>> -> memref<1x!tpu.dma_semaphore, #tpu.memory_space<semaphore_mem>>
    %91 = tpu.memref_squeeze %90 : memref<1x!tpu.dma_semaphore, #tpu.memory_space<semaphore_mem>> -> memref<!tpu.dma_semaphore, #tpu.memory_space<semaphore_mem>>
    tpu.wait_dma2 semaphore(%91 : memref<!tpu.dma_semaphore, #tpu.memory_space<semaphore_mem>>) src(%87 : memref<1x128xf32, #tpu.memory_space<any>>) dst(%89 : memref<1x128xf32, #tpu.memory_space<vmem>>)
    %c0_i32_56 = arith.constant 0 : i32
    %c0_i32_57 = arith.constant 0 : i32
    %92 = tpu.memref_slice %arg2[%c0_i32_56, %c0_i32_57] : memref<256x128xf32, #tpu.memory_space<any>> -> memref<1x128xf32, #tpu.memory_space<any>>
    %c15_i32 = arith.constant 15 : i32
    %c0_i32_58 = arith.constant 0 : i32
    %93 = tpu.memref_slice %arg4[%9, %c15_i32, %c0_i32_58] : memref<2x16x128xf32, #tpu.memory_space<vmem>> -> memref<1x1x128xf32, #tpu.memory_space<vmem>>
    %94 = tpu.memref_squeeze %93 : memref<1x1x128xf32, #tpu.memory_space<vmem>> -> memref<1x128xf32, #tpu.memory_space<vmem>>
    %95 = tpu.memref_slice %arg5[%9] : memref<2x!tpu.dma_semaphore, #tpu.memory_space<semaphore_mem>> -> memref<1x!tpu.dma_semaphore, #tpu.memory_space<semaphore_mem>>
    %96 = tpu.memref_squeeze %95 : memref<1x!tpu.dma_semaphore, #tpu.memory_space<semaphore_mem>> -> memref<!tpu.dma_semaphore, #tpu.memory_space<semaphore_mem>>
    tpu.wait_dma2 semaphore(%96 : memref<!tpu.dma_semaphore, #tpu.memory_space<semaphore_mem>>) src(%92 : memref<1x128xf32, #tpu.memory_space<any>>) dst(%94 : memref<1x128xf32, #tpu.memory_space<vmem>>)
    %97 = arith.index_cast %9 : i32 to index
    %c0 = arith.constant 0 : index
    %c0_59 = arith.constant 0 : index
    %98 = vector.load %arg4[%97, %c0, %c0_59] : memref<2x16x128xf32, #tpu.memory_space<vmem>>, vector<1x16x128xf32>
    %99 = vector.shape_cast %98 : vector<1x16x128xf32> to vector<16x128xf32>
    %c0_60 = arith.constant 0 : index
    %c0_61 = arith.constant 0 : index
    %100 = vector.load %arg3[%c0_60, %c0_61] : memref<16x128xf32, #tpu.memory_space<vmem>>, vector<16x128xf32>
    tpu.vector_store %arg3[%c0_60, %c0_61], %99 {strides = array<i32>} : memref<16x128xf32, #tpu.memory_space<vmem>>, vector<16x128xf32>,
    return
  }
  func.func @transform_1(%arg0: i32, %arg1: memref<16xi32, #tpu.memory_space<smem>>) -> (i32, i32) {
    %c0_i32 = arith.constant 0 : i32
    %c0_i32_0 = arith.constant 0 : i32
    return %arg0, %c0_i32 : i32, i32
  }
}

</mosaic_0001>

<llo_original>
// kernel: tpu_custom_call.1
$region0: #{tpu_custom_call.1}
  #allocation0 [shape = 'u32[]', space=smem, size = 0x4, offset = 0x4, fixed_abs, tag = 'smem constant byte address 0x4 - core index']
  #allocation1 [shape = 'u32[144,128]{1,0:T(1,128)}', space=vmem, size = 0x12000, scoped, tag = 'internal scratch']
  #allocation2 [shape = 'f32[2,16,128]{2,1,0:T(8,128)}', space=vmem, size = 0x4000, scoped, tag = 'scratch operand']
  #allocation3 [shape = 's32[2]{0}', space=sflag, size = 0x8, scoped, tag = 'scratch operand']
  #allocation4 [shape = 's32[1]{0}', space=sflag, size = 0x4, scoped, tag = 'scoped memory for tpu_custom_call.1']
  #allocation5 [shape = 'u8[512]{0}', space=smem, size = 0x200, scoped, tag = 'prefetched SMEM operand 0']
  #allocation8 [shape = 's32[]', space=sflag, size = 0x4, offset = 0, fixed_abs, tag = 'sflag constant byte address 0x0 - dummy sync flag']
  #allocation9 [shape = 's32[]', space=sflag, size = 0x4, offset = 0, fixed_abs, tag = 'sflag constant byte address 0x0 - dummy sync flag']
  #allocation10 [shape = 'u32[]', space=smem, size = 0x4, offset = 0x44, fixed_abs, tag = 'smem constant byte address 0x44 - assertion arg 0']
  #allocation11 [shape = 'u32[]', space=smem, size = 0x4, offset = 0x48, fixed_abs, tag = 'smem constant byte address 0x48 - assertion arg 1']
  #allocation12 [shape = 's32[]', space=sflag, size = 0x4, offset = 0, fixed_abs, tag = 'sflag constant byte address 0x0 - dummy sync flag']
  #allocation13 [shape = 's32[]', space=sflag, size = 0x4, offset = 0, fixed_abs, tag = 'sflag constant byte address 0x0 - dummy sync flag']
  #allocation14 [shape = 's32[]', space=sflag, size = 0x4, offset = 0, fixed_abs, tag = 'sflag constant byte address 0x0 - dummy sync flag']
  #allocation15 [shape = 's32[]', space=sflag, size = 0x4, offset = 0, fixed_abs, tag = 'sflag constant byte address 0x0 - dummy sync flag']
  #allocation16 [shape = 's32[]', space=sflag, size = 0x4, offset = 0, fixed_abs, tag = 'sflag constant byte address 0x0 - dummy sync flag']
  #allocation17 [shape = 's32[]', space=sflag, size = 0x4, offset = 0, fixed_abs, tag = 'sflag constant byte address 0x0 - dummy sync flag']
  #allocation18 [shape = 's32[]', space=sflag, size = 0x4, offset = 0, fixed_abs, tag = 'sflag constant byte address 0x0 - dummy sync flag']
  #allocation19 [shape = 's32[]', space=sflag, size = 0x4, offset = 0, fixed_abs, tag = 'sflag constant byte address 0x0 - dummy sync flag']
  #allocation20 [shape = 's32[]', space=sflag, size = 0x4, offset = 0, fixed_abs, tag = 'sflag constant byte address 0x0 - dummy sync flag']
  #allocation21 [shape = 's32[]', space=sflag, size = 0x4, offset = 0, fixed_abs, tag = 'sflag constant byte address 0x0 - dummy sync flag']
  #allocation22 [shape = 's32[]', space=sflag, size = 0x4, offset = 0, fixed_abs, tag = 'sflag constant byte address 0x0 - dummy sync flag']
  #allocation23 [shape = 's32[]', space=sflag, size = 0x4, offset = 0, fixed_abs, tag = 'sflag constant byte address 0x0 - dummy sync flag']
  #allocation24 [shape = 's32[]', space=sflag, size = 0x4, offset = 0, fixed_abs, tag = 'sflag constant byte address 0x0 - dummy sync flag']
  #allocation25 [shape = 's32[]', space=sflag, size = 0x4, offset = 0, fixed_abs, tag = 'sflag constant byte address 0x0 - dummy sync flag']
  #allocation26 [shape = 's32[]', space=sflag, size = 0x4, offset = 0, fixed_abs, tag = 'sflag constant byte address 0x0 - dummy sync flag']
  #allocation27 [shape = 's32[]', space=sflag, size = 0x4, offset = 0, fixed_abs, tag = 'sflag constant byte address 0x0 - dummy sync flag']
  #allocation28 [shape = 's32[]', space=sflag, size = 0x4, offset = 0, fixed_abs, tag = 'sflag constant byte address 0x0 - dummy sync flag']
  #allocation29 [shape = 's32[]', space=sflag, size = 0x4, offset = 0, fixed_abs, tag = 'sflag constant byte address 0x0 - dummy sync flag']
  #allocation30 [shape = 's32[]', space=sflag, size = 0x4, offset = 0, fixed_abs, tag = 'sflag constant byte address 0x0 - dummy sync flag']
  #allocation31 [shape = 's32[]', space=sflag, size = 0x4, offset = 0, fixed_abs, tag = 'sflag constant byte address 0x0 - dummy sync flag']
  #allocation32 [shape = 's32[]', space=sflag, size = 0x4, offset = 0, fixed_abs, tag = 'sflag constant byte address 0x0 - dummy sync flag']
  #allocation33 [shape = 's32[]', space=sflag, size = 0x4, offset = 0, fixed_abs, tag = 'sflag constant byte address 0x0 - dummy sync flag']
  #allocation34 [shape = 's32[]', space=sflag, size = 0x4, offset = 0, fixed_abs, tag = 'sflag constant byte address 0x0 - dummy sync flag']
  #allocation35 [shape = 's32[]', space=sflag, size = 0x4, offset = 0, fixed_abs, tag = 'sflag constant byte address 0x0 - dummy sync flag']
  #allocation36 [shape = 's32[]', space=sflag, size = 0x4, offset = 0, fixed_abs, tag = 'sflag constant byte address 0x0 - dummy sync flag']
  #allocation37 [shape = 's32[]', space=sflag, size = 0x4, offset = 0, fixed_abs, tag = 'sflag constant byte address 0x0 - dummy sync flag']
  #allocation38 [shape = 's32[]', space=sflag, size = 0x4, offset = 0, fixed_abs, tag = 'sflag constant byte address 0x0 - dummy sync flag']
  #allocation39 [shape = 's32[]', space=sflag, size = 0x4, offset = 0, fixed_abs, tag = 'sflag constant byte address 0x0 - dummy sync flag']
  #allocation40 [shape = 's32[]', space=sflag, size = 0x4, offset = 0, fixed_abs, tag = 'sflag constant byte address 0x0 - dummy sync flag']
  #allocation41 [shape = 's32[]', space=sflag, size = 0x4, offset = 0, fixed_abs, tag = 'sflag constant byte address 0x0 - dummy sync flag']
  #allocation42 [shape = 's32[]', space=sflag, size = 0x4, offset = 0, fixed_abs, tag = 'sflag constant byte address 0x0 - dummy sync flag']
  #allocation43 [shape = 's32[]', space=sflag, size = 0x4, offset = 0, fixed_abs, tag = 'sflag constant byte address 0x0 - dummy sync flag']
  #allocation44 [shape = 's32[]', space=sflag, size = 0x4, offset = 0, fixed_abs, tag = 'sflag constant byte address 0x0 - dummy sync flag']
  #allocation45 [shape = 's32[]', space=sflag, size = 0x4, offset = 0, fixed_abs, tag = 'sflag constant byte address 0x0 - dummy sync flag']
  #allocation46 [shape = 's32[]', space=sflag, size = 0x4, offset = 0, fixed_abs, tag = 'sflag constant byte address 0x0 - dummy sync flag']
  #allocation47 [shape = 's32[]', space=sflag, size = 0x4, offset = 0, fixed_abs, tag = 'sflag constant byte address 0x0 - dummy sync flag']
  #allocation48 [shape = 's32[]', space=sflag, size = 0x4, offset = 0, fixed_abs, tag = 'sflag constant byte address 0x0 - dummy sync flag']
  #allocation49 [shape = 's32[]', space=sflag, size = 0x4, offset = 0, fixed_abs, tag = 'sflag constant byte address 0x0 - dummy sync flag']
  #allocation50 [shape = 's32[]', space=sflag, size = 0x4, offset = 0, fixed_abs, tag = 'sflag constant byte address 0x0 - dummy sync flag']
  #allocation51 [shape = 's32[]', space=sflag, size = 0x4, offset = 0, fixed_abs, tag = 'sflag constant byte address 0x0 - dummy sync flag']
  #allocation52 [shape = 's32[]', space=sflag, size = 0x4, offset = 0, fixed_abs, tag = 'sflag constant byte address 0x0 - dummy sync flag']
  #allocation53 [shape = 's32[]', space=sflag, size = 0x4, offset = 0, fixed_abs, tag = 'sflag constant byte address 0x0 - dummy sync flag']
  #allocation54 [shape = 's32[]', space=sflag, size = 0x4, offset = 0, fixed_abs, tag = 'sflag constant byte address 0x0 - dummy sync flag']
  #allocation55 [shape = 's32[]', space=sflag, size = 0x4, offset = 0, fixed_abs, tag = 'sflag constant byte address 0x0 - dummy sync flag']
  #allocation56 [shape = 's32[]', space=sflag, size = 0x4, offset = 0, fixed_abs, tag = 'sflag constant byte address 0x0 - dummy sync flag']
  #allocation57 [shape = 's32[]', space=sflag, size = 0x4, offset = 0, fixed_abs, tag = 'sflag constant byte address 0x0 - dummy sync flag']
  #allocation58 [shape = 's32[]', space=sflag, size = 0x4, offset = 0, fixed_abs, tag = 'sflag constant byte address 0x0 - dummy sync flag']
  #allocation59 [shape = 's32[]', space=sflag, size = 0x4, offset = 0, fixed_abs, tag = 'sflag constant byte address 0x0 - dummy sync flag']
  #allocation60 [shape = 's32[]', space=sflag, size = 0x4, offset = 0, fixed_abs, tag = 'sflag constant byte address 0x0 - dummy sync flag']
  #allocation61 [shape = 's32[]', space=sflag, size = 0x4, offset = 0, fixed_abs, tag = 'sflag constant byte address 0x0 - dummy sync flag']
  #allocation62 [shape = 's32[]', space=sflag, size = 0x4, offset = 0, fixed_abs, tag = 'sflag constant byte address 0x0 - dummy sync flag']
  #allocation63 [shape = 's32[]', space=sflag, size = 0x4, offset = 0, fixed_abs, tag = 'sflag constant byte address 0x0 - dummy sync flag']
  #allocation64 [shape = 's32[]', space=sflag, size = 0x4, offset = 0, fixed_abs, tag = 'sflag constant byte address 0x0 - dummy sync flag']
  #allocation65 [shape = 's32[]', space=sflag, size = 0x4, offset = 0, fixed_abs, tag = 'sflag constant byte address 0x0 - dummy sync flag']
  #allocation66 [shape = 's32[]', space=sflag, size = 0x4, offset = 0, fixed_abs, tag = 'sflag constant byte address 0x0 - dummy sync flag']
  #allocation67 [shape = 's32[]', space=sflag, size = 0x4, offset = 0, fixed_abs, tag = 'sflag constant byte address 0x0 - dummy sync flag']
  #allocation68 [shape = 's32[]', space=sflag, size = 0x4, offset = 0, fixed_abs, tag = 'sflag constant byte address 0x0 - dummy sync flag']
  #allocation69 [shape = 's32[]', space=sflag, size = 0x4, offset = 0, fixed_abs, tag = 'sflag constant byte address 0x0 - dummy sync flag']
  #allocation70 [shape = 's32[]', space=sflag, size = 0x4, offset = 0, fixed_abs, tag = 'sflag constant byte address 0x0 - dummy sync flag']
  #allocation71 [shape = 's32[]', space=sflag, size = 0x4, offset = 0, fixed_abs, tag = 'sflag constant byte address 0x0 - dummy sync flag']
  #allocation72 [shape = 's32[]', space=sflag, size = 0x4, offset = 0, fixed_abs, tag = 'sflag constant byte address 0x0 - dummy sync flag']
  #allocation73 [shape = 's32[]', space=sflag, size = 0x4, offset = 0, fixed_abs, tag = 'sflag constant byte address 0x0 - dummy sync flag']
  %s0 = inlined_call_operand.hbm [shape: s32[16], index: 0, kind: input, shape index: {}]
  %s1 = inlined_call_operand.hbm [shape: f32[256,128], index: 1, kind: input, shape index: {}]
  %s2 = inlined_call_operand.hbm [shape: f32[16,128], index: 2, kind: output, shape index: {}]
  %s3 = sld [smem:[#allocation0]]
  $region146: #{tpu_custom_call.1} parent=0
    _
  %s5 = ssub.s32 1, %s3
  %s6 = scalar_select 0, %s5, %s3
  %8 = dma.hbm_to_smem %s0, 16, [#allocation5], [#allocation4]
  %9 = dma.done [#allocation4], 16
  %10 = sfence
  $region1: #{tpu_custom_call.1} parent=0
    #allocation6 [shape = 'u8[8192]{0}', space=vmem, size = 0x2000, scoped, tag = 'output window, operand 0, single buffered']
    #allocation7 [shape = 's32[1]{0}', space=sflag, size = 0x4, scoped, tag = 'scoped memory for tpu_custom_call.1']
    %11 = vsyncpa [#allocation7], 0
    %s12 = ssub.s32 0, 0
    %s13 = ssub.s32 0, 0
    %p14 = scmp.ne.s32.totalorder 0, 0
    %p15 = scmp.lt.s32.totalorder 0, 0
    %p16 = pnand %p15, %p14
    %p17 = pneg %p16
    %s18 = sadd.s32 0, 2
    %s19 = scalar_select %p17, %s18, 0
    %p20 = scmp.eq.s32.totalorder 0, 0
    // Predicated region
    $region2: #{tpu_custom_call.1} parent=1 // pred_check
      %p21 = pneg %p20
    $region3: #{tpu_custom_call.1} parent=1 // pred_check_branch
      %23 = sbr.rel (%p21) target = $region5
    $region4: #{tpu_custom_call.1} parent=1 // pred_region
      %s24 = sld [smem:[#allocation5]]
      %s25 = smul.addr %s24, 16
      %s26 = scalar_lea.hbm %s1, %s25
      // Predicated region
      $region6: #{tpu_custom_call.1} parent=4 // pred_check
        _
      $region7: #{tpu_custom_call.1} parent=4 // pred_check_branch
        %28 = sbr.rel target = $region9
      $region8: #{tpu_custom_call.1} parent=4 // pred_region
        %29 = sst [smem:[#allocation10]] [#allocation9]
        %30 = sst [smem:[#allocation11]] [#allocation8]
      $region9: #{tpu_custom_call.1} parent=4 // pred_fallthru
        _
      %32 = shalt.err (0)
      %s34 = sshll.u32 [#allocation2], 4
      %s35 = int_to_ptr.vmem [resolvable:$true] %s34
      %37 = dma.hbm_to_vmem [thread:$0]  %s26, 16, %s35, [#allocation3]
      %s38 = sld [smem:[#allocation5 + $0x1]]
      %s39 = smul.addr %s38, 16
      %s40 = scalar_lea.hbm %s1, %s39
      %s41 = scalar_lea.vmem [#allocation2], 1
      // Predicated region
      $region10: #{tpu_custom_call.1} parent=4 // pred_check
        _
      $region11: #{tpu_custom_call.1} parent=4 // pred_check_branch
        %43 = sbr.rel target = $region13
      $region12: #{tpu_custom_call.1} parent=4 // pred_region
        %44 = sst [smem:[#allocation10]] [#allocation13]
        %45 = sst [smem:[#allocation11]] [#allocation12]
      $region13: #{tpu_custom_call.1} parent=4 // pred_fallthru
        _
      %47 = shalt.err (0)
      %s49 = sshll.u32 %s41, 4
      %s50 = int_to_ptr.vmem [resolvable:$true] %s49
      %52 = dma.hbm_to_vmem [thread:$0]  %s40, 16, %s50, [#allocation3]
      %s53 = sld [smem:[#allocation5 + $0x2]]
      %s54 = smul.addr %s53, 16
      %s55 = scalar_lea.hbm %s1, %s54
      %s56 = scalar_lea.vmem [#allocation2], 2
      // Predicated region
      $region14: #{tpu_custom_call.1} parent=4 // pred_check
        _
      $region15: #{tpu_custom_call.1} parent=4 // pred_check_branch
        %58 = sbr.rel target = $region17
      $region16: #{tpu_custom_call.1} parent=4 // pred_region
        %59 = sst [smem:[#allocation10]] [#allocation15]
        %60 = sst [smem:[#allocation11]] [#allocation14]
      $region17: #{tpu_custom_call.1} parent=4 // pred_fallthru
        _
      %62 = shalt.err (0)
      %s64 = sshll.u32 %s56, 4
      %s65 = int_to_ptr.vmem [resolvable:$true] %s64
      %67 = dma.hbm_to_vmem [thread:$0]  %s55, 16, %s65, [#allocation3]
      %s68 = sld [smem:[#allocation5 + $0x3]]
      %s69 = smul.addr %s68, 16
      %s70 = scalar_lea.hbm %s1, %s69
      %s71 = scalar_lea.vmem [#allocation2], 3
      // Predicated region
      $region18: #{tpu_custom_call.1} parent=4 // pred_check
        _
      $region19: #{tpu_custom_call.1} parent=4 // pred_check_branch
        %73 = sbr.rel target = $region21
      $region20: #{tpu_custom_call.1} parent=4 // pred_region
        %74 = sst [smem:[#allocation10]] [#allocation17]
        %75 = sst [smem:[#allocation11]] [#allocation16]
      $region21: #{tpu_custom_call.1} parent=4 // pred_fallthru
        _
      %77 = shalt.err (0)
      %s79 = sshll.u32 %s71, 4
      %s80 = int_to_ptr.vmem [resolvable:$true] %s79
      %82 = dma.hbm_to_vmem [thread:$0]  %s70, 16, %s80, [#allocation3]
      %s83 = sld [smem:[#allocation5 + $0x4]]
      %s84 = smul.addr %s83, 16
      %s85 = scalar_lea.hbm %s1, %s84
      %s86 = scalar_lea.vmem [#allocation2], 4
      // Predicated region
      $region22: #{tpu_custom_call.1} parent=4 // pred_check
        _
      $region23: #{tpu_custom_call.1} parent=4 // pred_check_branch
        %88 = sbr.rel target = $region25
      $region24: #{tpu_custom_call.1} parent=4 // pred_region
        %89 = sst [smem:[#allocation10]] [#allocation19]
        %90 = sst [smem:[#allocation11]] [#allocation18]
      $region25: #{tpu_custom_call.1} parent=4 // pred_fallthru
        _
      %92 = shalt.err (0)
      %s94 = sshll.u32 %s86, 4
      %s95 = int_to_ptr.vmem [resolvable:$true] %s94
      %97 = dma.hbm_to_vmem [thread:$0]  %s85, 16, %s95, [#allocation3]
      %s98 = sld [smem:[#allocation5 + $0x5]]
      %s99 = smul.addr %s98, 16
      %s100 = scalar_lea.hbm %s1, %s99
      %s101 = scalar_lea.vmem [#allocation2], 5
      // Predicated region
      $region26: #{tpu_custom_call.1} parent=4 // pred_check
        _
      $region27: #{tpu_custom_call.1} parent=4 // pred_check_branch
        %103 = sbr.rel target = $region29
      $region28: #{tpu_custom_call.1} parent=4 // pred_region
        %104 = sst [smem:[#allocation10]] [#allocation21]
        %105 = sst [smem:[#allocation11]] [#allocation20]
      $region29: #{tpu_custom_call.1} parent=4 // pred_fallthru
        _
      %107 = shalt.err (0)
      %s109 = sshll.u32 %s101, 4
      %s110 = int_to_ptr.vmem [resolvable:$true] %s109
      %112 = dma.hbm_to_vmem [thread:$0]  %s100, 16, %s110, [#allocation3]
      %s113 = sld [smem:[#allocation5 + $0x6]]
      %s114 = smul.addr %s113, 16
      %s115 = scalar_lea.hbm %s1, %s114
      %s116 = scalar_lea.vmem [#allocation2], 6
      // Predicated region
      $region30: #{tpu_custom_call.1} parent=4 // pred_check
        _
      $region31: #{tpu_custom_call.1} parent=4 // pred_check_branch
        %118 = sbr.rel target = $region33
      $region32: #{tpu_custom_call.1} parent=4 // pred_region
        %119 = sst [smem:[#allocation10]] [#allocation23]
        %120 = sst [smem:[#allocation11]] [#allocation22]
      $region33: #{tpu_custom_call.1} parent=4 // pred_fallthru
        _
      %122 = shalt.err (0)
      %s124 = sshll.u32 %s116, 4
      %s125 = int_to_ptr.vmem [resolvable:$true] %s124
      %127 = dma.hbm_to_vmem [thread:$0]  %s115, 16, %s125, [#allocation3]
      %s128 = sld [smem:[#allocation5 + $0x7]]
      %s129 = smul.addr %s128, 16
      %s130 = scalar_lea.hbm %s1, %s129
      %s131 = scalar_lea.vmem [#allocation2], 7
      // Predicated region
      $region34: #{tpu_custom_call.1} parent=4 // pred_check
        _
      $region35: #{tpu_custom_call.1} parent=4 // pred_check_branch
        %133 = sbr.rel target = $region37
      $region36: #{tpu_custom_call.1} parent=4 // pred_region
        %134 = sst [smem:[#allocation10]] [#allocation25]
        %135 = sst [smem:[#allocation11]] [#allocation24]
      $region37: #{tpu_custom_call.1} parent=4 // pred_fallthru
        _
      %137 = shalt.err (0)
      %s139 = sshll.u32 %s131, 4
      %s140 = int_to_ptr.vmem [resolvable:$true] %s139
      %142 = dma.hbm_to_vmem [thread:$0]  %s130, 16, %s140, [#allocation3]
      %s143 = sld [smem:[#allocation5 + $0x8]]
      %s144 = smul.addr %s143, 16
      %s145 = scalar_lea.hbm %s1, %s144
      %s146 = scalar_lea.vmem [#allocation2], 8
      // Predicated region
      $region38: #{tpu_custom_call.1} parent=4 // pred_check
        _
      $region39: #{tpu_custom_call.1} parent=4 // pred_check_branch
        %148 = sbr.rel target = $region41
      $region40: #{tpu_custom_call.1} parent=4 // pred_region
        %149 = sst [smem:[#allocation10]] [#allocation27]
        %150 = sst [smem:[#allocation11]] [#allocation26]
      $region41: #{tpu_custom_call.1} parent=4 // pred_fallthru
        _
      %152 = shalt.err (0)
      %s154 = sshll.u32 %s146, 4
      %s155 = int_to_ptr.vmem [resolvable:$true] %s154
      %157 = dma.hbm_to_vmem [thread:$0]  %s145, 16, %s155, [#allocation3]
      %s158 = sld [smem:[#allocation5 + $0x9]]
      %s159 = smul.addr %s158, 16
      %s160 = scalar_lea.hbm %s1, %s159
      %s161 = scalar_lea.vmem [#allocation2], 9
      // Predicated region
      $region42: #{tpu_custom_call.1} parent=4 // pred_check
        _
      $region43: #{tpu_custom_call.1} parent=4 // pred_check_branch
        %163 = sbr.rel target = $region45
      $region44: #{tpu_custom_call.1} parent=4 // pred_region
        %164 = sst [smem:[#allocation10]] [#allocation29]
        %165 = sst [smem:[#allocation11]] [#allocation28]
      $region45: #{tpu_custom_call.1} parent=4 // pred_fallthru
        _
      %167 = shalt.err (0)
      %s169 = sshll.u32 %s161, 4
      %s170 = int_to_ptr.vmem [resolvable:$true] %s169
      %172 = dma.hbm_to_vmem [thread:$0]  %s160, 16, %s170, [#allocation3]
      %s173 = sld [smem:[#allocation5 + $0xa]]
      %s174 = smul.addr %s173, 16
      %s175 = scalar_lea.hbm %s1, %s174
      %s176 = scalar_lea.vmem [#allocation2], 10
      // Predicated region
      $region46: #{tpu_custom_call.1} parent=4 // pred_check
        _
      $region47: #{tpu_custom_call.1} parent=4 // pred_check_branch
        %178 = sbr.rel target = $region49
      $region48: #{tpu_custom_call.1} parent=4 // pred_region
        %179 = sst [smem:[#allocation10]] [#allocation31]
        %180 = sst [smem:[#allocation11]] [#allocation30]
      $region49: #{tpu_custom_call.1} parent=4 // pred_fallthru
        _
      %182 = shalt.err (0)
      %s184 = sshll.u32 %s176, 4
      %s185 = int_to_ptr.vmem [resolvable:$true] %s184
      %187 = dma.hbm_to_vmem [thread:$0]  %s175, 16, %s185, [#allocation3]
      %s188 = sld [smem:[#allocation5 + $0xb]]
      %s189 = smul.addr %s188, 16
      %s190 = scalar_lea.hbm %s1, %s189
      %s191 = scalar_lea.vmem [#allocation2], 11
      // Predicated region
      $region50: #{tpu_custom_call.1} parent=4 // pred_check
        _
      $region51: #{tpu_custom_call.1} parent=4 // pred_check_branch
        %193 = sbr.rel target = $region53
      $region52: #{tpu_custom_call.1} parent=4 // pred_region
        %194 = sst [smem:[#allocation10]] [#allocation33]
        %195 = sst [smem:[#allocation11]] [#allocation32]
      $region53: #{tpu_custom_call.1} parent=4 // pred_fallthru
        _
      %197 = shalt.err (0)
      %s199 = sshll.u32 %s191, 4
      %s200 = int_to_ptr.vmem [resolvable:$true] %s199
      %202 = dma.hbm_to_vmem [thread:$0]  %s190, 16, %s200, [#allocation3]
      %s203 = sld [smem:[#allocation5 + $0xc]]
      %s204 = smul.addr %s203, 16
      %s205 = scalar_lea.hbm %s1, %s204
      %s206 = scalar_lea.vmem [#allocation2], 12
      // Predicated region
      $region54: #{tpu_custom_call.1} parent=4 // pred_check
        _
      $region55: #{tpu_custom_call.1} parent=4 // pred_check_branch
        %208 = sbr.rel target = $region57
      $region56: #{tpu_custom_call.1} parent=4 // pred_region
        %209 = sst [smem:[#allocation10]] [#allocation35]
        %210 = sst [smem:[#allocation11]] [#allocation34]
      $region57: #{tpu_custom_call.1} parent=4 // pred_fallthru
        _
      %212 = shalt.err (0)
      %s214 = sshll.u32 %s206, 4
      %s215 = int_to_ptr.vmem [resolvable:$true] %s214
      %217 = dma.hbm_to_vmem [thread:$0]  %s205, 16, %s215, [#allocation3]
      %s218 = sld [smem:[#allocation5 + $0xd]]
      %s219 = smul.addr %s218, 16
      %s220 = scalar_lea.hbm %s1, %s219
      %s221 = scalar_lea.vmem [#allocation2], 13
      // Predicated region
      $region58: #{tpu_custom_call.1} parent=4 // pred_check
        _
      $region59: #{tpu_custom_call.1} parent=4 // pred_check_branch
        %223 = sbr.rel target = $region61
      $region60: #{tpu_custom_call.1} parent=4 // pred_region
        %224 = sst [smem:[#allocation10]] [#allocation37]
        %225 = sst [smem:[#allocation11]] [#allocation36]
      $region61: #{tpu_custom_call.1} parent=4 // pred_fallthru
        _
      %227 = shalt.err (0)
      %s229 = sshll.u32 %s221, 4
      %s230 = int_to_ptr.vmem [resolvable:$true] %s229
      %232 = dma.hbm_to_vmem [thread:$0]  %s220, 16, %s230, [#allocation3]
      %s233 = sld [smem:[#allocation5 + $0xe]]
      %s234 = smul.addr %s233, 16
      %s235 = scalar_lea.hbm %s1, %s234
      %s236 = scalar_lea.vmem [#allocation2], 14
      // Predicated region
      $region62: #{tpu_custom_call.1} parent=4 // pred_check
        _
      $region63: #{tpu_custom_call.1} parent=4 // pred_check_branch
        %238 = sbr.rel target = $region65
      $region64: #{tpu_custom_call.1} parent=4 // pred_region
        %239 = sst [smem:[#allocation10]] [#allocation39]
        %240 = sst [smem:[#allocation11]] [#allocation38]
      $region65: #{tpu_custom_call.1} parent=4 // pred_fallthru
        _
      %242 = shalt.err (0)
      %s244 = sshll.u32 %s236, 4
      %s245 = int_to_ptr.vmem [resolvable:$true] %s244
      %247 = dma.hbm_to_vmem [thread:$0]  %s235, 16, %s245, [#allocation3]
      %s248 = sld [smem:[#allocation5 + $0xf]]
      %s249 = smul.addr %s248, 16
      %s250 = scalar_lea.hbm %s1, %s249
      %s251 = scalar_lea.vmem [#allocation2], 15
      // Predicated region
      $region66: #{tpu_custom_call.1} parent=4 // pred_check
        _
      $region67: #{tpu_custom_call.1} parent=4 // pred_check_branch
        %253 = sbr.rel target = $region69
      $region68: #{tpu_custom_call.1} parent=4 // pred_region
        %254 = sst [smem:[#allocation10]] [#allocation41]
        %255 = sst [smem:[#allocation11]] [#allocation40]
      $region69: #{tpu_custom_call.1} parent=4 // pred_fallthru
        _
      %257 = shalt.err (0)
      %s259 = sshll.u32 %s251, 4
      %s260 = int_to_ptr.vmem [resolvable:$true] %s259
      %262 = dma.hbm_to_vmem [thread:$0]  %s250, 16, %s260, [#allocation3]
    $region5: #{tpu_custom_call.1} parent=1 // pred_fallthru
      _
    %s263 = sadd.s32 0, 1
    %p264 = scmp.lt.s32.totalorder %s263, 1
    // Predicated region
    $region70: #{tpu_custom_call.1} parent=1 // pred_check
      %p265 = pneg %p264
    $region71: #{tpu_custom_call.1} parent=1 // pred_check_branch
      %267 = sbr.rel (%p265) target = $region73
    $region72: #{tpu_custom_call.1} parent=1 // pred_region
      %s268 = ssub.s32 1, %s19
      %s269 = smul.u32 %s263, 16
      %s270 = sld [smem:[#allocation5 + %s269]]
      %s271 = smul.addr %s270, 16
      %s272 = scalar_lea.hbm %s1, %s271
      %s273 = smul.u32 %s268, 16
      %s274 = scalar_lea.vmem [#allocation2], %s273
      %s275 = scalar_lea.sflag [#allocation3], %s268
      // Predicated region
      $region74: #{tpu_custom_call.1} parent=72 // pred_check
        _
      $region75: #{tpu_custom_call.1} parent=72 // pred_check_branch
        %277 = sbr.rel target = $region77
      $region76: #{tpu_custom_call.1} parent=72 // pred_region
        %278 = sst [smem:[#allocation10]] [#allocation43]
        %279 = sst [smem:[#allocation11]] [#allocation42]
      $region77: #{tpu_custom_call.1} parent=72 // pred_fallthru
        _
      %281 = shalt.err (0)
      %s283 = sshll.u32 %s274, 4
      %s284 = int_to_ptr.vmem [resolvable:$true] %s283
      %286 = dma.hbm_to_vmem [thread:$0]  %s272, 16, %s284, %s275
      %s287 = sadd.s32 %s269, 1
      %s288 = sld [smem:[#allocation5 + %s287]]
      %s289 = smul.addr %s288, 16
      %s290 = scalar_lea.hbm %s1, %s289
      %s291 = sadd.s32 1, %s273
      %s292 = scalar_lea.vmem [#allocation2], %s291
      // Predicated region
      $region78: #{tpu_custom_call.1} parent=72 // pred_check
        _
      $region79: #{tpu_custom_call.1} parent=72 // pred_check_branch
        %294 = sbr.rel target = $region81
      $region80: #{tpu_custom_call.1} parent=72 // pred_region
        %295 = sst [smem:[#allocation10]] [#allocation45]
        %296 = sst [smem:[#allocation11]] [#allocation44]
      $region81: #{tpu_custom_call.1} parent=72 // pred_fallthru
        _
      %298 = shalt.err (0)
      %s300 = sshll.u32 %s292, 4
      %s301 = int_to_ptr.vmem [resolvable:$true] %s300
      %303 = dma.hbm_to_vmem [thread:$0]  %s290, 16, %s301, %s275
      %s304 = sadd.s32 %s269, 2
      %s305 = sld [smem:[#allocation5 + %s304]]
      %s306 = smul.addr %s305, 16
      %s307 = scalar_lea.hbm %s1, %s306
      %s308 = sadd.s32 2, %s273
      %s309 = scalar_lea.vmem [#allocation2], %s308
      // Predicated region
      $region82: #{tpu_custom_call.1} parent=72 // pred_check
        _
      $region83: #{tpu_custom_call.1} parent=72 // pred_check_branch
        %311 = sbr.rel target = $region85
      $region84: #{tpu_custom_call.1} parent=72 // pred_region
        %312 = sst [smem:[#allocation10]] [#allocation47]
        %313 = sst [smem:[#allocation11]] [#allocation46]
      $region85: #{tpu_custom_call.1} parent=72 // pred_fallthru
        _
      %315 = shalt.err (0)
      %s317 = sshll.u32 %s309, 4
      %s318 = int_to_ptr.vmem [resolvable:$true] %s317
      %320 = dma.hbm_to_vmem [thread:$0]  %s307, 16, %s318, %s275
      %s321 = sadd.s32 %s269, 3
      %s322 = sld [smem:[#allocation5 + %s321]]
      %s323 = smul.addr %s322, 16
      %s324 = scalar_lea.hbm %s1, %s323
      %s325 = sadd.s32 3, %s273
      %s326 = scalar_lea.vmem [#allocation2], %s325
      // Predicated region
      $region86: #{tpu_custom_call.1} parent=72 // pred_check
        _
      $region87: #{tpu_custom_call.1} parent=72 // pred_check_branch
        %328 = sbr.rel target = $region89
      $region88: #{tpu_custom_call.1} parent=72 // pred_region
        %329 = sst [smem:[#allocation10]] [#allocation49]
        %330 = sst [smem:[#allocation11]] [#allocation48]
      $region89: #{tpu_custom_call.1} parent=72 // pred_fallthru
        _
      %332 = shalt.err (0)
      %s334 = sshll.u32 %s326, 4
      %s335 = int_to_ptr.vmem [resolvable:$true] %s334
      %337 = dma.hbm_to_vmem [thread:$0]  %s324, 16, %s335, %s275
      %s338 = sadd.s32 %s269, 4
      %s339 = sld [smem:[#allocation5 + %s338]]
      %s340 = smul.addr %s339, 16
      %s341 = scalar_lea.hbm %s1, %s340
      %s342 = sadd.s32 4, %s273
      %s343 = scalar_lea.vmem [#allocation2], %s342
      // Predicated region
      $region90: #{tpu_custom_call.1} parent=72 // pred_check
        _
      $region91: #{tpu_custom_call.1} parent=72 // pred_check_branch
        %345 = sbr.rel target = $region93
      $region92: #{tpu_custom_call.1} parent=72 // pred_region
        %346 = sst [smem:[#allocation10]] [#allocation51]
        %347 = sst [smem:[#allocation11]] [#allocation50]
      $region93: #{tpu_custom_call.1} parent=72 // pred_fallthru
        _
      %349 = shalt.err (0)
      %s351 = sshll.u32 %s343, 4
      %s352 = int_to_ptr.vmem [resolvable:$true] %s351
      %354 = dma.hbm_to_vmem [thread:$0]  %s341, 16, %s352, %s275
      %s355 = sadd.s32 %s269, 5
      %s356 = sld [smem:[#allocation5 + %s355]]
      %s357 = smul.addr %s356, 16
      %s358 = scalar_lea.hbm %s1, %s357
      %s359 = sadd.s32 5, %s273
      %s360 = scalar_lea.vmem [#allocation2], %s359
      // Predicated region
      $region94: #{tpu_custom_call.1} parent=72 // pred_check
        _
      $region95: #{tpu_custom_call.1} parent=72 // pred_check_branch
        %362 = sbr.rel target = $region97
      $region96: #{tpu_custom_call.1} parent=72 // pred_region
        %363 = sst [smem:[#allocation10]] [#allocation53]
        %364 = sst [smem:[#allocation11]] [#allocation52]
      $region97: #{tpu_custom_call.1} parent=72 // pred_fallthru
        _
      %366 = shalt.err (0)
      %s368 = sshll.u32 %s360, 4
      %s369 = int_to_ptr.vmem [resolvable:$true] %s368
      %371 = dma.hbm_to_vmem [thread:$0]  %s358, 16, %s369, %s275
      %s372 = sadd.s32 %s269, 6
      %s373 = sld [smem:[#allocation5 + %s372]]
      %s374 = smul.addr %s373, 16
      %s375 = scalar_lea.hbm %s1, %s374
      %s376 = sadd.s32 6, %s273
      %s377 = scalar_lea.vmem [#allocation2], %s376
      // Predicated region
      $region98: #{tpu_custom_call.1} parent=72 // pred_check
        _
      $region99: #{tpu_custom_call.1} parent=72 // pred_check_branch
        %379 = sbr.rel target = $region101
      $region100: #{tpu_custom_call.1} parent=72 // pred_region
        %380 = sst [smem:[#allocation10]] [#allocation55]
        %381 = sst [smem:[#allocation11]] [#allocation54]
      $region101: #{tpu_custom_call.1} parent=72 // pred_fallthru
        _
      %383 = shalt.err (0)
      %s385 = sshll.u32 %s377, 4
      %s386 = int_to_ptr.vmem [resolvable:$true] %s385
      %388 = dma.hbm_to_vmem [thread:$0]  %s375, 16, %s386, %s275
      %s389 = sadd.s32 %s269, 7
      %s390 = sld [smem:[#allocation5 + %s389]]
      %s391 = smul.addr %s390, 16
      %s392 = scalar_lea.hbm %s1, %s391
      %s393 = sadd.s32 7, %s273
      %s394 = scalar_lea.vmem [#allocation2], %s393
      // Predicated region
      $region102: #{tpu_custom_call.1} parent=72 // pred_check
        _
      $region103: #{tpu_custom_call.1} parent=72 // pred_check_branch
        %396 = sbr.rel target = $region105
      $region104: #{tpu_custom_call.1} parent=72 // pred_region
        %397 = sst [smem:[#allocation10]] [#allocation57]
        %398 = sst [smem:[#allocation11]] [#allocation56]
      $region105: #{tpu_custom_call.1} parent=72 // pred_fallthru
        _
      %400 = shalt.err (0)
      %s402 = sshll.u32 %s394, 4
      %s403 = int_to_ptr.vmem [resolvable:$true] %s402
      %405 = dma.hbm_to_vmem [thread:$0]  %s392, 16, %s403, %s275
      %s406 = sadd.s32 %s269, 8
      %s407 = sld [smem:[#allocation5 + %s406]]
      %s408 = smul.addr %s407, 16
      %s409 = scalar_lea.hbm %s1, %s408
      %s410 = sadd.s32 8, %s273
      %s411 = scalar_lea.vmem [#allocation2], %s410
      // Predicated region
      $region106: #{tpu_custom_call.1} parent=72 // pred_check
        _
      $region107: #{tpu_custom_call.1} parent=72 // pred_check_branch
        %413 = sbr.rel target = $region109
      $region108: #{tpu_custom_call.1} parent=72 // pred_region
        %414 = sst [smem:[#allocation10]] [#allocation59]
        %415 = sst [smem:[#allocation11]] [#allocation58]
      $region109: #{tpu_custom_call.1} parent=72 // pred_fallthru
        _
      %417 = shalt.err (0)
      %s419 = sshll.u32 %s411, 4
      %s420 = int_to_ptr.vmem [resolvable:$true] %s419
      %422 = dma.hbm_to_vmem [thread:$0]  %s409, 16, %s420, %s275
      %s423 = sadd.s32 %s269, 9
      %s424 = sld [smem:[#allocation5 + %s423]]
      %s425 = smul.addr %s424, 16
      %s426 = scalar_lea.hbm %s1, %s425
      %s427 = sadd.s32 9, %s273
      %s428 = scalar_lea.vmem [#allocation2], %s427
      // Predicated region
      $region110: #{tpu_custom_call.1} parent=72 // pred_check
        _
      $region111: #{tpu_custom_call.1} parent=72 // pred_check_branch
        %430 = sbr.rel target = $region113
      $region112: #{tpu_custom_call.1} parent=72 // pred_region
        %431 = sst [smem:[#allocation10]] [#allocation61]
        %432 = sst [smem:[#allocation11]] [#allocation60]
      $region113: #{tpu_custom_call.1} parent=72 // pred_fallthru
        _
      %434 = shalt.err (0)
      %s436 = sshll.u32 %s428, 4
      %s437 = int_to_ptr.vmem [resolvable:$true] %s436
      %439 = dma.hbm_to_vmem [thread:$0]  %s426, 16, %s437, %s275
      %s440 = sadd.s32 %s269, 10
      %s441 = sld [smem:[#allocation5 + %s440]]
      %s442 = smul.addr %s441, 16
      %s443 = scalar_lea.hbm %s1, %s442
      %s444 = sadd.s32 10, %s273
      %s445 = scalar_lea.vmem [#allocation2], %s444
      // Predicated region
      $region114: #{tpu_custom_call.1} parent=72 // pred_check
        _
      $region115: #{tpu_custom_call.1} parent=72 // pred_check_branch
        %447 = sbr.rel target = $region117
      $region116: #{tpu_custom_call.1} parent=72 // pred_region
        %448 = sst [smem:[#allocation10]] [#allocation63]
        %449 = sst [smem:[#allocation11]] [#allocation62]
      $region117: #{tpu_custom_call.1} parent=72 // pred_fallthru
        _
      %451 = shalt.err (0)
      %s453 = sshll.u32 %s445, 4
      %s454 = int_to_ptr.vmem [resolvable:$true] %s453
      %456 = dma.hbm_to_vmem [thread:$0]  %s443, 16, %s454, %s275
      %s457 = sadd.s32 %s269, 11
      %s458 = sld [smem:[#allocation5 + %s457]]
      %s459 = smul.addr %s458, 16
      %s460 = scalar_lea.hbm %s1, %s459
      %s461 = sadd.s32 11, %s273
      %s462 = scalar_lea.vmem [#allocation2], %s461
      // Predicated region
      $region118: #{tpu_custom_call.1} parent=72 // pred_check
        _
      $region119: #{tpu_custom_call.1} parent=72 // pred_check_branch
        %464 = sbr.rel target = $region121
      $region120: #{tpu_custom_call.1} parent=72 // pred_region
        %465 = sst [smem:[#allocation10]] [#allocation65]
        %466 = sst [smem:[#allocation11]] [#allocation64]
      $region121: #{tpu_custom_call.1} parent=72 // pred_fallthru
        _
      %468 = shalt.err (0)
      %s470 = sshll.u32 %s462, 4
      %s471 = int_to_ptr.vmem [resolvable:$true] %s470
      %473 = dma.hbm_to_vmem [thread:$0]  %s460, 16, %s471, %s275
      %s474 = sadd.s32 %s269, 12
      %s475 = sld [smem:[#allocation5 + %s474]]
      %s476 = smul.addr %s475, 16
      %s477 = scalar_lea.hbm %s1, %s476
      %s478 = sadd.s32 12, %s273
      %s479 = scalar_lea.vmem [#allocation2], %s478
      // Predicated region
      $region122: #{tpu_custom_call.1} parent=72 // pred_check
        _
      $region123: #{tpu_custom_call.1} parent=72 // pred_check_branch
        %481 = sbr.rel target = $region125
      $region124: #{tpu_custom_call.1} parent=72 // pred_region
        %482 = sst [smem:[#allocation10]] [#allocation67]
        %483 = sst [smem:[#allocation11]] [#allocation66]
      $region125: #{tpu_custom_call.1} parent=72 // pred_fallthru
        _
      %485 = shalt.err (0)
      %s487 = sshll.u32 %s479, 4
      %s488 = int_to_ptr.vmem [resolvable:$true] %s487
      %490 = dma.hbm_to_vmem [thread:$0]  %s477, 16, %s488, %s275
      %s491 = sadd.s32 %s269, 13
      %s492 = sld [smem:[#allocation5 + %s491]]
      %s493 = smul.addr %s492, 16
      %s494 = scalar_lea.hbm %s1, %s493
      %s495 = sadd.s32 13, %s273
      %s496 = scalar_lea.vmem [#allocation2], %s495
      // Predicated region
      $region126: #{tpu_custom_call.1} parent=72 // pred_check
        _
      $region127: #{tpu_custom_call.1} parent=72 // pred_check_branch
        %498 = sbr.rel target = $region129
      $region128: #{tpu_custom_call.1} parent=72 // pred_region
        %499 = sst [smem:[#allocation10]] [#allocation69]
        %500 = sst [smem:[#allocation11]] [#allocation68]
      $region129: #{tpu_custom_call.1} parent=72 // pred_fallthru
        _
      %502 = shalt.err (0)
      %s504 = sshll.u32 %s496, 4
      %s505 = int_to_ptr.vmem [resolvable:$true] %s504
      %507 = dma.hbm_to_vmem [thread:$0]  %s494, 16, %s505, %s275
      %s508 = sadd.s32 %s269, 14
      %s509 = sld [smem:[#allocation5 + %s508]]
      %s510 = smul.addr %s509, 16
      %s511 = scalar_lea.hbm %s1, %s510
      %s512 = sadd.s32 14, %s273
      %s513 = scalar_lea.vmem [#allocation2], %s512
      // Predicated region
      $region130: #{tpu_custom_call.1} parent=72 // pred_check
        _
      $region131: #{tpu_custom_call.1} parent=72 // pred_check_branch
        %515 = sbr.rel target = $region133
      $region132: #{tpu_custom_call.1} parent=72 // pred_region
        %516 = sst [smem:[#allocation10]] [#allocation71]
        %517 = sst [smem:[#allocation11]] [#allocation70]
      $region133: #{tpu_custom_call.1} parent=72 // pred_fallthru
        _
      %519 = shalt.err (0)
      %s521 = sshll.u32 %s513, 4
      %s522 = int_to_ptr.vmem [resolvable:$true] %s521
      %524 = dma.hbm_to_vmem [thread:$0]  %s511, 16, %s522, %s275
      %s525 = sadd.s32 %s269, 15
      %s526 = sld [smem:[#allocation5 + %s525]]
      %s527 = smul.addr %s526, 16
      %s528 = scalar_lea.hbm %s1, %s527
      %s529 = sadd.s32 15, %s273
      %s530 = scalar_lea.vmem [#allocation2], %s529
      // Predicated region
      $region134: #{tpu_custom_call.1} parent=72 // pred_check
        _
      $region135: #{tpu_custom_call.1} parent=72 // pred_check_branch
        %532 = sbr.rel target = $region137
      $region136: #{tpu_custom_call.1} parent=72 // pred_region
        %533 = sst [smem:[#allocation10]] [#allocation73]
        %534 = sst [smem:[#allocation11]] [#allocation72]
      $region137: #{tpu_custom_call.1} parent=72 // pred_fallthru
        _
      %536 = shalt.err (0)
      %s538 = sshll.u32 %s530, 4
      %s539 = int_to_ptr.vmem [resolvable:$true] %s538
      %541 = dma.hbm_to_vmem [thread:$0]  %s528, 16, %s539, %s275
    $region73: #{tpu_custom_call.1} parent=1 // pred_fallthru
      _
    %s542 = scalar_lea.sflag [#allocation3], %s19
    %s543 = smul.u32 1, 1
    %s544 = sshll.u32 %s543, 4
    %545 = dma.done %s542, %s544
    %s546 = sshll.u32 %s543, 4
    %547 = dma.done %s542, %s546
    %s548 = sshll.u32 %s543, 4
    %549 = dma.done %s542, %s548
    %s550 = sshll.u32 %s543, 4
    %551 = dma.done %s542, %s550
    %s552 = sshll.u32 %s543, 4
    %553 = dma.done %s542, %s552
    %s554 = sshll.u32 %s543, 4
    %555 = dma.done %s542, %s554
    %s556 = sshll.u32 %s543, 4
    %557 = dma.done %s542, %s556
    %s558 = sshll.u32 %s543, 4
    %559 = dma.done %s542, %s558
    %s560 = sshll.u32 %s543, 4
    %561 = dma.done %s542, %s560
    %s562 = sshll.u32 %s543, 4
    %563 = dma.done %s542, %s562
    %s564 = sshll.u32 %s543, 4
    %565 = dma.done %s542, %s564
    %s566 = sshll.u32 %s543, 4
    %567 = dma.done %s542, %s566
    %s568 = sshll.u32 %s543, 4
    %569 = dma.done %s542, %s568
    %s570 = sshll.u32 %s543, 4
    %571 = dma.done %s542, %s570
    %s572 = sshll.u32 %s543, 4
    %573 = dma.done %s542, %s572
    %s574 = sshll.u32 %s543, 4
    %575 = dma.done %s542, %s574
    %s576 = smul.u32 %s19, 16
    %s577 = scalar_lea.vmem [#allocation2], %s576
    %v578 = vld [vmem:[%s577] sm:$0xff]
    %v579 = vld [vmem:[%s577 + $0x8] sm:$0xff]
    %580 = vst [vmem:[#allocation6] sm:$0xff] %v578
    %581 = vst [vmem:[#allocation6 + $0x8] sm:$0xff] %v579
    // Predicated region
    $region138: #{tpu_custom_call.1} parent=1 // pred_check
      _
    $region139: #{tpu_custom_call.1} parent=1 // pred_check_branch
      %583 = sbr.rel (0) target = $region141
    $region140: #{tpu_custom_call.1} parent=1 // pred_region
      %s585 = ssub.s32 256, 256
      %586 = vsyncadd [#allocation7], %s585
      %s587 = sshll.u32 [#allocation6], 4
      %s588 = int_to_ptr.vmem [resolvable:$true] %s587
      %593 = dma.vmem_to_hbm [thread:$0]  %s588, 256, %s2, [#allocation7], 128, 128, 8
    $region141: #{tpu_custom_call.1} parent=1 // pred_fallthru
      _
    // Predicated region
    $region142: #{tpu_custom_call.1} parent=1 // pred_check
      _
    $region143: #{tpu_custom_call.1} parent=1 // pred_check_branch
      %595 = sbr.rel (0) target = $region145
    $region144: #{tpu_custom_call.1} parent=1 // pred_region
      %596 = dma.done [#allocation7], 256
    $region145: #{tpu_custom_call.1} parent=1 // pred_fallthru
      _
    %597 = vsyncpa [#allocation7], 1
  %598 = vsyncmov [#allocation3]
  %s599 = vpop.sfrf %598
  %p600 = scmp.eq.s32.totalorder %s599, 0
  %p601 = pneg %p600
  %603 = shalt.err (%p601)
  %s604 = scalar_lea.sflag [#allocation3], 1
  %605 = vsyncmov %s604
  %s606 = vpop.sfrf %605
  %p607 = scmp.eq.s32.totalorder %s606, 0
  %p608 = pneg %p607
  %610 = shalt.err (%p608)

</llo_original>
